<compile_context>
chip_gen: v7x
topology: tpu7x:2x2x1
jax: 0.10.0
libtpu: 0.0.40
codegen_flags: <defaults>
</compile_context>

<pallas_src>
from functools import partial

import jax
import jax.numpy as jnp
from jax.experimental import pallas as pl
from jax.experimental.pallas import tpu as pltpu


def _round_up(x, m):
    return (x + m - 1) // m * m


def _tpu_defaults():
    """Per-generation tuning: gram row-tile, scoped VMEM limit, bf16 EUP."""
    kind = ""
    try:
        kind = jax.devices()[0].device_kind.lower()
    except Exception:
        pass
    if "v7" in kind or "7x" in kind:
        # 64 MiB VMEM/TC: tighter tiles and scoped limit; bf16 EUP available.
        return {"tq": 256, "vmem": 48 * 1024 * 1024, "eup_bf16": True,
                "attn_budget": 12 * 1024 * 1024}
    if "v6" in kind:
        return {"tq": 512, "vmem": 96 * 1024 * 1024, "eup_bf16": True,
                "attn_budget": 24 * 1024 * 1024}
    if "v5" in kind:
        # v5e EUP has no bf16 path: keep the tanh in f32.
        return {"tq": 512, "vmem": 96 * 1024 * 1024, "eup_bf16": False,
                "attn_budget": 24 * 1024 * 1024}
    return {"tq": 256, "vmem": 64 * 1024 * 1024, "eup_bf16": False,
            "attn_budget": 16 * 1024 * 1024}


# ----------------------------------------------------------------------------
# Fused kernel: patch-embed -> fuse -> seg head  +  gram/sigmoid (attn_pred)
# ----------------------------------------------------------------------------
def _fused_isclip_kernel(
    patches_ref,  # (1, Np, P)     bf16
    wp_ref,       # (P, Cp)        bf16
    wf_ref,       # (Cp, Ep)       bf16
    wc_ref,       # (Ep, Kp)       bf16
    seg_ref,      # (1, Np, Kp)    bf16  (same block for every gram tile t)
    attn_ref,     # (1, tq, Np)    bf16  (row tile t of the gram)
    fts_ref,      # (Np, Ep)       bf16  VMEM, persists across t
    ftsT_ref,     # (Ep, Np)       bf16  VMEM, persists across t
    *,
    tq,
    proj_chunk,
    eup_bf16,
):
    t = pl.program_id(1)
    n_chunks = fts_ref.shape[0] // proj_chunk

    # ---- projection chain: once per batch element (t == 0), row-chunked ----
    @pl.when(t == 0)
    def _():
        def body(c, carry):
            r = pl.multiple_of(c * proj_chunk, proj_chunk)
            x = patches_ref[0, pl.ds(r, proj_chunk), :]                # (pc, P)
            tok = jnp.dot(x, wp_ref[...],
                          preferred_element_type=jnp.float32)          # (pc, Cp)
            fts = jnp.dot(tok.astype(jnp.bfloat16), wf_ref[...],
                          preferred_element_type=jnp.float32)          # (pc, Ep)
            fts_bf = fts.astype(jnp.bfloat16)
            fts_ref[pl.ds(r, proj_chunk), :] = fts_bf
            # Transpose once per batch element (f32 transpose, then cast) so
            # the per-tile gram is a plain MXU-friendly (tq,E)@(E,N) dot.
            ftsT_ref[:, pl.ds(r, proj_chunk)] = fts.T.astype(jnp.bfloat16)
            seg = jnp.dot(fts_bf, wc_ref[...],
                          preferred_element_type=jnp.float32)          # (pc, Kp)
            seg_ref[0, pl.ds(r, proj_chunk), :] = seg.astype(seg_ref.dtype)
            return carry

        jax.lax.fori_loop(0, n_chunks, body, 0, unroll=(n_chunks <= 8))

    # ---- attn_pred row tile: sigmoid(fts[tile] @ fts^T) ---------------------
    r0 = pl.multiple_of(t * tq, tq)
    q = fts_ref[pl.ds(r0, tq), :]                                       # (tq, Ep)
    g = jnp.dot(q, ftsT_ref[...],
                preferred_element_type=jnp.float32)                     # (tq, Np) f32
    # sigmoid(x) = 0.5 * tanh(0.5 * x) + 0.5  -> single EUP transcendental.
    if eup_bf16:
        gh = (0.5 * g).astype(jnp.bfloat16)
        attn = jnp.tanh(gh) * 0.5 + 0.5
    else:
        attn = 0.5 * jnp.tanh(0.5 * g) + 0.5
    attn_ref[0] = attn.astype(attn_ref.dtype)


def fused_projections_and_gram(patches, w_patch, w_fuse, w_cls, *, tq=None,
                               vmem_limit_bytes=None, eup_bf16=None):
    """patches (B, Np, P) bf16 (Np pre-padded to 128), padded bf16 weights
    -> (seg_pad, attn_pad).

    seg_pad : (B, Np, Kp)  bf16  (valid classes in [:, :N, :num_classes])
    attn_pad: (B, Np, Np)  bf16  = sigmoid(fts @ fts^T)  (valid in [:, :N, :N];
              zero-padded token rows/cols produce sigmoid(0)=0.5 — slice them).
    """
    B, Np, P = patches.shape
    Pp, Cp = w_patch.shape
    Ep = w_fuse.shape[1]
    Kp = w_cls.shape[1]
    assert Pp == P and w_fuse.shape[0] == Cp and w_cls.shape[0] == Ep
    assert Np % 128 == 0, "token count must be pre-padded to a multiple of 128"

    cfg = _tpu_defaults()
    if tq is None:
        tq = cfg["tq"]
    if vmem_limit_bytes is None:
        vmem_limit_bytes = cfg["vmem"]
    if eup_bf16 is None:
        eup_bf16 = cfg["eup_bf16"]

    # Row tile that divides Np; shrink if the per-step attn working set
    # ((tq,Np) bf16 out block x2 buffers + (tq,Np) f32 matmul temp) gets big.
    tq = min(tq, Np)
    while Np % tq != 0:
        tq //= 2
    while tq > 128 and tq * Np * (2 * 2 + 4) > cfg["attn_budget"]:
        tq //= 2
    T = Np // tq

    proj_chunk = 256 if Np % 256 == 0 else 128

    kernel = partial(_fused_isclip_kernel, tq=tq, proj_chunk=proj_chunk,
                     eup_bf16=eup_bf16)

    # TODO(synk): when B == 1 on v7x (2 TCs/chip), de-fuse into a projection
    # kernel + a gram kernel with the tile axis "parallel" so both cores work.
    return pl.pallas_call(
        kernel,
        out_shape=(
            jax.ShapeDtypeStruct((B, Np, Kp), jnp.bfloat16),
            jax.ShapeDtypeStruct((B, Np, Np), jnp.bfloat16),
        ),
        grid=(B, T),
        in_specs=[
            pl.BlockSpec((1, Np, P), lambda b, t: (b, 0, 0)),   # fetched once per b
            pl.BlockSpec((P, Cp), lambda b, t: (0, 0)),         # weights fetched once
            pl.BlockSpec((Cp, Ep), lambda b, t: (0, 0)),
            pl.BlockSpec((Ep, Kp), lambda b, t: (0, 0)),
        ],
        out_specs=(
            pl.BlockSpec((1, Np, Kp), lambda b, t: (b, 0, 0)),  # resident across t
            pl.BlockSpec((1, tq, Np), lambda b, t: (b, t, 0)),  # row-tiled gram
        ),
        scratch_shapes=[
            pltpu.VMEM((Np, Ep), jnp.bfloat16),
            pltpu.VMEM((Ep, Np), jnp.bfloat16),
        ],
        compiler_params=pltpu.CompilerParams(
            # NOTE: axis 1 must stay "arbitrary": seg output + fts scratches
            # are resident across it.
            dimension_semantics=("parallel", "arbitrary"),
            vmem_limit_bytes=vmem_limit_bytes,
        ),
    )(patches, w_patch, w_fuse, w_cls)


# ----------------------------------------------------------------------------
# tiny XLA helpers (deliberately NOT Pallas — these arrays are far too small
# to amortize a kernel launch)
# ----------------------------------------------------------------------------
def _l2_normalize_rows(x):
    return x * jax.lax.rsqrt(jnp.sum(x * x, axis=-1, keepdims=True))


# ----------------------------------------------------------------------------
# ISCLIP (Pallas) — deterministic synthetic parameters
# ----------------------------------------------------------------------------
class ISCLIPPallas:
    def __init__(
        self,
        num_classes=6,
        embedding_dim=32,   # module default 256
        in_channels=32,     # module default 512
        clip_dim=64,        # CLIP text dim, module uses 512
        num_bg=4,           # number of background category prompts
        patch_size=16,
        cam_bg_thres=1.0,   # self.cam_bg_thres = 1
        seed=0,
    ):
        self.num_classes = num_classes
        self.embedding_dim = embedding_dim
        self.in_channels = in_channels
        self.clip_dim = clip_dim
        self.num_bg = num_bg
        self.patch_size = patch_size
        self.cam_bg_thres = cam_bg_thres

        # lane-dense (128-padded) parameter shapes; zero padding is exact
        # (padded rows/cols contribute nothing to the matmul results).
        # Do NOT pad beyond 128: these matmuls are HBM-bound; deeper MXU fill
        # on v6e/v7x would only add DMA/VMEM bytes.
        self._cin_pad = _round_up(in_channels, 128)
        self._e_pad = _round_up(embedding_dim, 128)
        self._k_pad = _round_up(num_classes, 128)

        k = jax.random.split(jax.random.PRNGKey(seed), 5)
        ps = patch_size
        P = 3 * ps * ps

        # TODO(synk): CLIP ViT encoder (clip.load / generate_clip_fts) is not
        # reproducible in-script; a deterministic patch-embedding matmul stands
        # in for the visual stem.
        w_patch = 0.02 * jax.random.normal(k[0], (P, in_channels), jnp.float32)
        # TODO(synk): SegFormerHead internals unavailable; simplified to a
        # 1x1-conv (channel-wise linear) fuse with the module's dims.
        w_fuse = 0.02 * jax.random.normal(k[1], (in_channels, embedding_dim), jnp.float32)
        # TODO(synk): DecoderTransformer(width=E, layers=3, heads=8) not
        # reproducible; simplified to a linear seg head onto num_classes.
        w_cls = 0.02 * jax.random.normal(k[2], (embedding_dim, num_classes), jnp.float32)

        self.w_patch = (
            jnp.zeros((P, self._cin_pad), jnp.bfloat16)
            .at[:, :in_channels].set(w_patch.astype(jnp.bfloat16))
        )
        self.w_fuse = (
            jnp.zeros((self._cin_pad, self._e_pad), jnp.bfloat16)
            .at[:in_channels, :embedding_dim].set(w_fuse.astype(jnp.bfloat16))
        )
        self.w_cls = (
            jnp.zeros((self._e_pad, self._k_pad), jnp.bfloat16)
            .at[:embedding_dim, :num_classes].set(w_cls.astype(jnp.bfloat16))
        )

        # zeroshot_classifier: encoder output stand-ins, then the module's
        # normalize math (tiny — left to XLA with rsqrt).
        fg_raw = jax.random.normal(k[3], (num_classes, clip_dim), jnp.float32)
        bg_raw = jax.random.normal(k[4], (num_bg, clip_dim), jnp.float32)
        self.fg_text_features = _l2_normalize_rows(fg_raw)
        self.bg_text_features = _l2_normalize_rows(bg_raw)

    def forward(self, img, requires_prompt=True):
        B, C, H, W = img.shape
        ps = self.patch_size
        h, w = H // ps, W // ps
        N = h * w
        Np = _round_up(N, 128)   # lane-dense token count for the kernel
        K = self.num_classes

        # --- patchify (glue, plain JAX) ---------------------------------------
        # TODO(synk): could be folded into the kernel's input DMA via an
        # index_map / allow_input_fusion; kept in XLA since the image is small.
        patches = (
            img.reshape(B, C, h, ps, w, ps)
            .transpose(0, 2, 4, 1, 3, 5)
            .reshape(B, N, C * ps * ps)
            .astype(jnp.bfloat16)
        )
        if Np != N:
            # zero rows -> zero fts rows -> exact results for valid tokens;
            # padded gram entries become sigmoid(0)=0.5 and are sliced below.
            patches = jnp.pad(patches, ((0, 0), (0, Np - N), (0, 0)))

        # --- fused Pallas kernel: patch-embed -> fuse -> seg head + attn_pred --
        seg_pad, attn_pad = fused_projections_and_gram(
            patches, self.w_patch, self.w_fuse, self.w_cls
        )
        seg = (
            seg_pad[:, :N, :K].astype(jnp.float32)
            .transpose(0, 2, 1).reshape(B, K, h, w)
        )
        # attn_pred = sigmoid(attn_fts_flatten^T bmm attn_fts_flatten): (B, N, N)
        attn_pred = attn_pad[:, :N, :N]

        # --- CAM post-processing math (bg score + concat + argmax), tiny -> XLA
        # TODO(synk): GradCAM / perform_single_*_cam need the full CLIP model +
        # image files; synthetic per-class cams derived from seg stand in, but
        # the bg_score / concat math is the module's.
        cams = jax.nn.sigmoid(seg).reshape(B, K, N)
        mx = jnp.max(cams, axis=1, keepdims=True)
        if self.cam_bg_thres == 1.0:
            bg = 1.0 - mx
        else:
            bg = jnp.power(1.0 - mx, self.cam_bg_thres)
        cams_with_bg = jnp.concatenate([bg, cams], axis=1)          # (B, K+1, N)

        valid_key = jnp.pad(jnp.arange(K, dtype=jnp.int32) + 1, (1, 0))
        # TODO(synk): PAR refinement (_refine_cams) is an external CRF-like
        # module; only the argmax + valid_key remap is kept here.
        cam_labels = valid_key[jnp.argmax(cams_with_bg, axis=1)].reshape(B, h, w)

        if not requires_prompt:
            return seg, cam_labels, attn_pred

        # TODO(synk): per-image text refinement (fuse_transformer, NLTK, GMM)
        # is external; refined prompts fall back to the base text features.
        refined_prompts = jnp.concatenate(
            [self.fg_text_features, self.bg_text_features], axis=0
        )
        all_refined_prompts = jnp.broadcast_to(
            refined_prompts, (B,) + refined_prompts.shape
        )
        prompts_org = refined_prompts
        prompts = [prompts_org, all_refined_prompts]
        return seg, cam_labels, attn_pred, prompts


# ----------------------------------------------------------------------------
if __name__ == "__main__":
    key = jax.random.PRNGKey(0)
    B, C, H, W = 2, 3, 64, 64
    img = jax.random.normal(key, (B, C, H, W), dtype=jnp.float32)

    model = ISCLIPPallas(
        num_classes=6, embedding_dim=32, in_channels=32, clip_dim=64, num_bg=4
    )
    seg, cam_labels, attn_pred, prompts = model.forward(img)
    jax.block_until_ready((seg, cam_labels, attn_pred, prompts[0], prompts[1]))

    h, w = H // 16, W // 16
    assert seg.shape == (B, 6, h, w)
    assert cam_labels.shape == (B, h, w)
    assert attn_pred.shape == (B, h * w, h * w)
    assert prompts[0].shape == (10, 64) and prompts[1].shape == (B, 10, 64)
    assert bool(jnp.all(jnp.isfinite(seg)))
    print("KERNEL_OK")
</pallas_src>

<mosaic_0001>
module attributes {stable_mosaic.version = 11 : i64} {
  func.func @_fused_isclip_kernel(%arg0: i32, %arg1: i32, %arg2: memref<1x128x768xbf16, #tpu.memory_space<vmem>>, %arg3: memref<768x128xbf16, #tpu.memory_space<vmem>>, %arg4: memref<128x128xbf16, #tpu.memory_space<vmem>>, %arg5: memref<128x128xbf16, #tpu.memory_space<vmem>>, %arg6: memref<1x128x128xbf16, #tpu.memory_space<vmem>>, %arg7: memref<1x128x128xbf16, #tpu.memory_space<vmem>>, %arg8: memref<128x128xbf16, #tpu.memory_space<vmem>>, %arg9: memref<128x128xbf16, #tpu.memory_space<vmem>>) attributes {dimension_semantics = [#tpu.dimension_semantics<parallel>, #tpu.dimension_semantics<arbitrary>], iteration_bounds = array<i64: 2, 1>, scalar_prefetch = 0 : i64, scratch_operands = 2 : i64, tpu.core_type = #tpu.core_type<tc>, window_params = [{transform_indices = @transform_0, window_bounds = array<i64: 1, 128, 768>}, {pipeline_mode = #tpu.pipeline_mode<synchronous>, transform_indices = @transform_1, window_bounds = array<i64: 768, 128>}, {pipeline_mode = #tpu.pipeline_mode<synchronous>, transform_indices = @transform_2, window_bounds = array<i64: 128, 128>}, {pipeline_mode = #tpu.pipeline_mode<synchronous>, transform_indices = @transform_3, window_bounds = array<i64: 128, 128>}, {transform_indices = @transform_4, window_bounds = array<i64: 1, 128, 128>}, {transform_indices = @transform_5, window_bounds = array<i64: 1, 128, 128>}]} {
    %c0_i32 = arith.constant 0 : i32
    %0 = arith.cmpi eq, %arg1, %c0_i32 : i32
    %1 = arith.extui %0 : i1 to i32
    %c0_i32_0 = arith.constant 0 : i32
    %2 = arith.cmpi ne, %1, %c0_i32_0 : i32
    scf.if %2 {
      %c0_i32_9 = arith.constant 0 : i32
      %c128_i32_10 = arith.constant 128 : i32
      %20 = arith.muli %c0_i32_9, %c128_i32_10 : i32
      %21 = tpu.assume_multiple %20, 128 : i32
      %c0_11 = arith.constant 0 : index
      %22 = arith.index_cast %21 : i32 to index
      %c0_12 = arith.constant 0 : index
      %23 = vector.load %arg2[%c0_11, %22, %c0_12] : memref<1x128x768xbf16, #tpu.memory_space<vmem>>, vector<1x128x768xbf16>
      %24 = vector.shape_cast %23 : vector<1x128x768xbf16> to vector<128x768xbf16>
      %c0_13 = arith.constant 0 : index
      %c0_14 = arith.constant 0 : index
      %25 = vector.load %arg3[%c0_13, %c0_14] : memref<768x128xbf16, #tpu.memory_space<vmem>>, vector<768x128xbf16>
      %cst_15 = arith.constant dense<0.000000e+00> : vector<128x128xf32>
      %26 = tpu.matmul %24, %25, %cst_15 {dimension_numbers = #tpu.dot_dimension_numbers<[1], [0], [0], [1], [0, 0, 1, 1], [], []>} : vector<128x768xbf16>, vector<768x128xbf16>, vector<128x128xf32> -> vector<128x128xf32>
      %27 = arith.truncf %26 : vector<128x128xf32> to vector<128x128xbf16>
      %c0_16 = arith.constant 0 : index
      %c0_17 = arith.constant 0 : index
      %28 = vector.load %arg4[%c0_16, %c0_17] : memref<128x128xbf16, #tpu.memory_space<vmem>>, vector<128x128xbf16>
      %cst_18 = arith.constant dense<0.000000e+00> : vector<128x128xf32>
      %29 = tpu.matmul %27, %28, %cst_18 {dimension_numbers = #tpu.dot_dimension_numbers<[1], [0], [0], [1], [0, 0, 1, 1], [], []>} : vector<128x128xbf16>, vector<128x128xbf16>, vector<128x128xf32> -> vector<128x128xf32>
      %30 = arith.truncf %29 : vector<128x128xf32> to vector<128x128xbf16>
      %31 = arith.index_cast %21 : i32 to index
      %c0_19 = arith.constant 0 : index
      %32 = vector.load %arg8[%31, %c0_19] : memref<128x128xbf16, #tpu.memory_space<vmem>>, vector<128x128xbf16>
      tpu.vector_store %arg8[%31, %c0_19], %30 {strides = array<i32>} : memref<128x128xbf16, #tpu.memory_space<vmem>>, vector<128x128xbf16>,
      %33 = tpu.transpose %29, [1, 0] : vector<128x128xf32> -> vector<128x128xf32>
      %34 = arith.truncf %33 : vector<128x128xf32> to vector<128x128xbf16>
      %c0_20 = arith.constant 0 : index
      %35 = arith.index_cast %21 : i32 to index
      %36 = vector.load %arg9[%c0_20, %35] : memref<128x128xbf16, #tpu.memory_space<vmem>>, vector<128x128xbf16>
      tpu.vector_store %arg9[%c0_20, %35], %34 {strides = array<i32>} : memref<128x128xbf16, #tpu.memory_space<vmem>>, vector<128x128xbf16>,
      %c0_21 = arith.constant 0 : index
      %c0_22 = arith.constant 0 : index
      %37 = vector.load %arg5[%c0_21, %c0_22] : memref<128x128xbf16, #tpu.memory_space<vmem>>, vector<128x128xbf16>
      %cst_23 = arith.constant dense<0.000000e+00> : vector<128x128xf32>
      %38 = tpu.matmul %30, %37, %cst_23 {dimension_numbers = #tpu.dot_dimension_numbers<[1], [0], [0], [1], [0, 0, 1, 1], [], []>} : vector<128x128xbf16>, vector<128x128xbf16>, vector<128x128xf32> -> vector<128x128xf32>
      %39 = arith.truncf %38 : vector<128x128xf32> to vector<128x128xbf16>
      %c0_24 = arith.constant 0 : index
      %40 = arith.index_cast %21 : i32 to index
      %c0_25 = arith.constant 0 : index
      %41 = vector.load %arg6[%c0_24, %40, %c0_25] : memref<1x128x128xbf16, #tpu.memory_space<vmem>>, vector<1x128x128xbf16>
      %42 = vector.shape_cast %41 : vector<1x128x128xbf16> to vector<128x128xbf16>
      %43 = vector.shape_cast %39 : vector<128x128xbf16> to vector<1x128x128xbf16>
      tpu.vector_store %arg6[%c0_24, %40, %c0_25], %43 {strides = array<i32>} : memref<1x128x128xbf16, #tpu.memory_space<vmem>>, vector<1x128x128xbf16>,
      %c1_i32 = arith.constant 1 : i32
    } else {
    }
    %c128_i32 = arith.constant 128 : i32
    %3 = arith.muli %arg1, %c128_i32 : i32
    %4 = tpu.assume_multiple %3, 128 : i32
    %5 = arith.index_cast %4 : i32 to index
    %c0 = arith.constant 0 : index
    %6 = vector.load %arg8[%5, %c0] : memref<128x128xbf16, #tpu.memory_space<vmem>>, vector<128x128xbf16>
    %c0_1 = arith.constant 0 : index
    %c0_2 = arith.constant 0 : index
    %7 = vector.load %arg9[%c0_1, %c0_2] : memref<128x128xbf16, #tpu.memory_space<vmem>>, vector<128x128xbf16>
    %cst = arith.constant dense<0.000000e+00> : vector<128x128xf32>
    %8 = tpu.matmul %6, %7, %cst {dimension_numbers = #tpu.dot_dimension_numbers<[1], [0], [0], [1], [0, 0, 1, 1], [], []>} : vector<128x128xbf16>, vector<128x128xbf16>, vector<128x128xf32> -> vector<128x128xf32>
    %cst_3 = arith.constant 5.000000e-01 : f32
    %9 = vector.broadcast %cst_3 : f32 to vector<128x128xf32>
    %10 = arith.mulf %9, %8 : vector<128x128xf32>
    %11 = math.tanh %10 : vector<128x128xf32>
    %cst_4 = arith.constant 5.000000e-01 : f32
    %12 = vector.broadcast %cst_4 : f32 to vector<128x128xf32>
    %13 = arith.mulf %12, %11 : vector<128x128xf32>
    %cst_5 = arith.constant 5.000000e-01 : f32
    %14 = vector.broadcast %cst_5 : f32 to vector<128x128xf32>
    %15 = arith.addf %13, %14 : vector<128x128xf32>
    %16 = arith.truncf %15 : vector<128x128xf32> to vector<128x128xbf16>
    %c0_6 = arith.constant 0 : index
    %c0_7 = arith.constant 0 : index
    %c0_8 = arith.constant 0 : index
    %17 = vector.load %arg7[%c0_6, %c0_7, %c0_8] : memref<1x128x128xbf16, #tpu.memory_space<vmem>>, vector<1x128x128xbf16>
    %18 = vector.shape_cast %17 : vector<1x128x128xbf16> to vector<128x128xbf16>
    %19 = vector.shape_cast %16 : vector<128x128xbf16> to vector<1x128x128xbf16>
    tpu.vector_store %arg7[%c0_6, %c0_7, %c0_8], %19 {strides = array<i32>} : memref<1x128x128xbf16, #tpu.memory_space<vmem>>, vector<1x128x128xbf16>,
    return
  }
  func.func @transform_0(%arg0: i32, %arg1: i32) -> (i32, i32, i32) {
    %c0_i32 = arith.constant 0 : i32
    %c0_i32_0 = arith.constant 0 : i32
    %c0_i32_1 = arith.constant 0 : i32
    return %arg0, %c0_i32, %c0_i32_0 : i32, i32, i32
  }
  func.func @transform_1(%arg0: i32, %arg1: i32) -> (i32, i32) {
    %c0_i32 = arith.constant 0 : i32
    %c0_i32_0 = arith.constant 0 : i32
    %c0_i32_1 = arith.constant 0 : i32
    return %c0_i32, %c0_i32_0 : i32, i32
  }
  func.func @transform_2(%arg0: i32, %arg1: i32) -> (i32, i32) {
    %c0_i32 = arith.constant 0 : i32
    %c0_i32_0 = arith.constant 0 : i32
    %c0_i32_1 = arith.constant 0 : i32
    return %c0_i32, %c0_i32_0 : i32, i32
  }
  func.func @transform_3(%arg0: i32, %arg1: i32) -> (i32, i32) {
    %c0_i32 = arith.constant 0 : i32
    %c0_i32_0 = arith.constant 0 : i32
    %c0_i32_1 = arith.constant 0 : i32
    return %c0_i32, %c0_i32_0 : i32, i32
  }
  func.func @transform_4(%arg0: i32, %arg1: i32) -> (i32, i32, i32) {
    %c0_i32 = arith.constant 0 : i32
    %c0_i32_0 = arith.constant 0 : i32
    %c0_i32_1 = arith.constant 0 : i32
    return %arg0, %c0_i32, %c0_i32_0 : i32, i32, i32
  }
  func.func @transform_5(%arg0: i32, %arg1: i32) -> (i32, i32, i32) {
    %c0_i32 = arith.constant 0 : i32
    %c0_i32_0 = arith.constant 0 : i32
    return %arg0, %arg1, %c0_i32 : i32, i32, i32
  }
}

</mosaic_0001>

<llo_original>
// kernel: tpu_custom_call.1
$region0: #{tpu_custom_call.1}
  #allocation0 [shape = 'u32[]', space=smem, size = 0x4, offset = 0x4, fixed_abs, tag = 'smem constant byte address 0x4 - core index']
  #allocation1 [shape = 'u32[144,128]{1,0:T(1,128)}', space=vmem, size = 0x12000, scoped, tag = 'internal scratch']
  #allocation2 [shape = 'bf16[128,128]{1,0:T(16,128)(2,1)}', space=vmem, size = 0x8000, scoped, tag = 'scratch operand']
  #allocation3 [shape = 'bf16[128,128]{1,0:T(16,128)(2,1)}', space=vmem, size = 0x8000, scoped, tag = 'scratch operand']
  %s0 = inlined_call_operand.hbm [shape: bf16[2,128,768], index: 0, kind: input, shape index: {}]
  %s1 = inlined_call_operand.hbm [shape: bf16[768,128], index: 1, kind: input, shape index: {}]
  %s2 = inlined_call_operand.hbm [shape: bf16[128,128], index: 2, kind: input, shape index: {}]
  %s3 = inlined_call_operand.hbm [shape: bf16[128,128], index: 3, kind: input, shape index: {}]
  %s4 = inlined_call_operand.hbm [shape: bf16[2,128,128], index: 4, kind: output, shape index: {0}]
  %s5 = inlined_call_operand.hbm [shape: bf16[2,128,128], index: 5, kind: output, shape index: {1}]
  %6 = xla_tuple %s4, %s5
  %s7 = sld [smem:[#allocation0]]
  $region77: #{tpu_custom_call.1} parent=0
    _
  %s9 = ssub.s32 1, %s7
  %s10 = scalar_select 0, %s9, %s7
  $region1: #{tpu_custom_call.1} parent=0
    #allocation4 [shape = 'u8[393216]{0}', space=vmem, size = 0x60000, scoped, tag = 'input window, operand 0']
    #allocation5 [shape = 's32[2]{0}', space=sflag, size = 0x8, scoped, tag = 'scoped memory for tpu_custom_call.1']
    #allocation6 [shape = 's32[2]{0}', space=sflag, size = 0x8, scoped, tag = 'scoped memory for tpu_custom_call.1']
    #allocation7 [shape = 'u8[196608]{0}', space=vmem, size = 0x30000, scoped, tag = 'input window, operand 1, single buffered']
    #allocation8 [shape = 's32[1]{0}', space=sflag, size = 0x4, scoped, tag = 'scoped memory for tpu_custom_call.1']
    #allocation9 [shape = 'u8[32768]{0}', space=vmem, size = 0x8000, scoped, tag = 'input window, operand 2, single buffered']
    #allocation10 [shape = 'u8[32768]{0}', space=vmem, size = 0x8000, scoped, tag = 'input window, operand 3, single buffered']
    #allocation11 [shape = 's32[1]{0}', space=sflag, size = 0x4, scoped, tag = 'scoped memory for tpu_custom_call.1']
    #allocation12 [shape = 'u8[65536]{0}', space=vmem, size = 0x10000, scoped, tag = 'output window, operand 0']
    #allocation13 [shape = 'u8[65536]{0}', space=vmem, size = 0x10000, scoped, tag = 'output window, operand 1']
    #allocation14 [shape = 's32[2]{0}', space=sflag, size = 0x8, scoped, tag = 'scoped memory for tpu_custom_call.1']
    %11 = vsyncpa [#allocation5], 0
    %s12 = scalar_lea.sflag [#allocation5], 1
    %13 = vsyncpa %s12, 0
    %14 = vsyncpa [#allocation8], 0
    %15 = vsyncpa [#allocation11], 0
    %16 = vsyncpa [#allocation6], 0
    %s17 = scalar_lea.sflag [#allocation6], 1
    %18 = vsyncpa %s17, 0
    %19 = vsyncpa [#allocation14], 0
    %s20 = scalar_lea.sflag [#allocation14], 1
    %21 = vsyncpa %s20, 0
    loop: start=0, step=1, limit=4
    $region2: #{tpu_custom_call.1} parent=1 // loop_pre_header
      _
    $region3: #{tpu_custom_call.1} parent=1 // loop_header
      %s23 = sphi 0, %s27
      %p24 = scmp.ge.s32.totalorder %s23, 4
      %s30 = sphi 0, %s42
      %s31 = sphi 0, %s38
      %s32 = sphi 0, %s30
      %s33 = sphi 0, %s31
      %s34 = sphi 0, %s32
      %s35 = sphi 0, %s33
      %s45 = sphi 0, %s47
      %s48 = sphi 0, %s45
      %s49 = sphi 0, %s48
      %s65 = sphi 0, %s49
      %s69 = sphi 0, %s69
      %s71 = sphi 0, %s69
      %s72 = sphi 0, %s71
      %s86 = sphi 0, %s72
      %s90 = sphi 0, %s90
      %s92 = sphi 0, %s90
      %s93 = sphi 0, %s92
      %s107 = sphi 0, %s93
      %s111 = sphi 0, %s111
      %s113 = sphi 0, %s111
      %s114 = sphi 0, %s113
      %s128 = sphi 0, %s114
      %s134 = sphi 0, %s136
      %s137 = sphi 0, %s134
      %s138 = sphi 0, %s137
      %s154 = sphi 0, %s138
      %s162 = sphi 0, %s164
      %s165 = sphi 0, %s162
      %s166 = sphi 0, %s165
      %s182 = sphi 0, %s166
    $region4: #{tpu_custom_call.1} parent=1 // loop_header_branch
      %26 = sbr.rel (%p24) target = $region8
    $region5: #{tpu_custom_call.1} parent=1 // loop_body
      %s28 = ssub.s32 %s23, 1
      %s29 = ssub.s32 %s23, 2
      %s36 = sadd.s32 1, %s31
      %p37 = scmp.ge.s32.totalorder %s36, 1
      %s38 = scalar_select %p37, 0, %s36
      %s39 = sadd.s32 1, %s30
      %s40 = scalar_select %p37, %s39, %s30
      %p41 = scmp.ge.s32.totalorder %s40, 2
      %s42 = scalar_select %p41, 0, %s40
      %s43 = ssub.s32 %s30, %s42
      %p44 = scmp.eq.s32.totalorder %s43, 0
      %s46 = sadd.s32 %s45, 1
      %s47 = scalar_select %p44, %s45, %s46
      %p50 = pneg %p44
      %p51 = scmp.eq.s32.totalorder %s23, 1
      %p52 = por %p50, %p51
      %p53 = scmp.ne.s32.totalorder %s45, %s48
      %p54 = scmp.eq.s32.totalorder %s23, 0
      %p55 = por %p53, %p54
      %p56 = scmp.ne.s32.totalorder %s45, %s48
      %p57 = scmp.eq.s32.totalorder %s28, 1
      %p58 = por %p56, %p57
      %p59 = scmp.ne.s32.totalorder %s48, %s49
      %p60 = scmp.eq.s32.totalorder %s28, 0
      %p61 = por %p59, %p60
      %p62 = scmp.ne.s32.totalorder %s48, %s49
      %p63 = scmp.eq.s32.totalorder %s29, 1
      %p64 = por %p62, %p63
      %p66 = scmp.ne.s32.totalorder %s49, %s65
      %p67 = scmp.eq.s32.totalorder %s29, 0
      %p68 = por %p66, %p67
      %s70 = sadd.s32 %s69, 1
      %p73 = scmp.eq.s32.totalorder %s23, 1
      %p74 = scmp.ne.s32.totalorder %s69, %s71
      %p75 = scmp.eq.s32.totalorder %s23, 0
      %p76 = por %p74, %p75
      %p77 = scmp.ne.s32.totalorder %s69, %s71
      %p78 = scmp.eq.s32.totalorder %s28, 1
      %p79 = por %p77, %p78
      %p80 = scmp.ne.s32.totalorder %s71, %s72
      %p81 = scmp.eq.s32.totalorder %s28, 0
      %p82 = por %p80, %p81
      %p83 = scmp.ne.s32.totalorder %s71, %s72
      %p84 = scmp.eq.s32.totalorder %s29, 1
      %p85 = por %p83, %p84
      %p87 = scmp.ne.s32.totalorder %s72, %s86
      %p88 = scmp.eq.s32.totalorder %s29, 0
      %p89 = por %p87, %p88
      %s91 = sadd.s32 %s90, 1
      %p94 = scmp.eq.s32.totalorder %s23, 1
      %p95 = scmp.ne.s32.totalorder %s90, %s92
      %p96 = scmp.eq.s32.totalorder %s23, 0
      %p97 = por %p95, %p96
      %p98 = scmp.ne.s32.totalorder %s90, %s92
      %p99 = scmp.eq.s32.totalorder %s28, 1
      %p100 = por %p98, %p99
      %p101 = scmp.ne.s32.totalorder %s92, %s93
      %p102 = scmp.eq.s32.totalorder %s28, 0
      %p103 = por %p101, %p102
      %p104 = scmp.ne.s32.totalorder %s92, %s93
      %p105 = scmp.eq.s32.totalorder %s29, 1
      %p106 = por %p104, %p105
      %p108 = scmp.ne.s32.totalorder %s93, %s107
      %p109 = scmp.eq.s32.totalorder %s29, 0
      %p110 = por %p108, %p109
      %s112 = sadd.s32 %s111, 1
      %p115 = scmp.eq.s32.totalorder %s23, 1
      %p116 = scmp.ne.s32.totalorder %s111, %s113
      %p117 = scmp.eq.s32.totalorder %s23, 0
      %p118 = por %p116, %p117
      %p119 = scmp.ne.s32.totalorder %s111, %s113
      %p120 = scmp.eq.s32.totalorder %s28, 1
      %p121 = por %p119, %p120
      %p122 = scmp.ne.s32.totalorder %s113, %s114
      %p123 = scmp.eq.s32.totalorder %s28, 0
      %p124 = por %p122, %p123
      %p125 = scmp.ne.s32.totalorder %s113, %s114
      %p126 = scmp.eq.s32.totalorder %s29, 1
      %p127 = por %p125, %p126
      %p129 = scmp.ne.s32.totalorder %s114, %s128
      %p130 = scmp.eq.s32.totalorder %s29, 0
      %p131 = por %p129, %p130
      %s132 = ssub.s32 %s30, %s42
      %p133 = scmp.eq.s32.totalorder %s132, 0
      %s135 = sadd.s32 %s134, 1
      %s136 = scalar_select %p133, %s134, %s135
      %p139 = pneg %p133
      %p140 = scmp.eq.s32.totalorder %s23, 1
      %p141 = por %p139, %p140
      %p142 = scmp.ne.s32.totalorder %s134, %s137
      %p143 = scmp.eq.s32.totalorder %s23, 0
      %p144 = por %p142, %p143
      %p145 = scmp.ne.s32.totalorder %s134, %s137
      %p146 = scmp.eq.s32.totalorder %s28, 1
      %p147 = por %p145, %p146
      %p148 = scmp.ne.s32.totalorder %s137, %s138
      %p149 = scmp.eq.s32.totalorder %s28, 0
      %p150 = por %p148, %p149
      %p151 = scmp.ne.s32.totalorder %s137, %s138
      %p152 = scmp.eq.s32.totalorder %s29, 1
      %p153 = por %p151, %p152
      %p155 = scmp.ne.s32.totalorder %s138, %s154
      %p156 = scmp.eq.s32.totalorder %s29, 0
      %p157 = por %p155, %p156
      %s158 = ssub.s32 %s30, %s42
      %s159 = ssub.s32 %s31, %s38
      %s160 = sor.u32 %s158, %s159
      %p161 = scmp.eq.s32.totalorder %s160, 0
      %s163 = sadd.s32 %s162, 1
      %s164 = scalar_select %p161, %s162, %s163
      %p167 = pneg %p161
      %p168 = scmp.eq.s32.totalorder %s23, 1
      %p169 = por %p167, %p168
      %p170 = scmp.ne.s32.totalorder %s162, %s165
      %p171 = scmp.eq.s32.totalorder %s23, 0
      %p172 = por %p170, %p171
      %p173 = scmp.ne.s32.totalorder %s162, %s165
      %p174 = scmp.eq.s32.totalorder %s28, 1
      %p175 = por %p173, %p174
      %p176 = scmp.ne.s32.totalorder %s165, %s166
      %p177 = scmp.eq.s32.totalorder %s28, 0
      %p178 = por %p176, %p177
      %p179 = scmp.ne.s32.totalorder %s165, %s166
      %p180 = scmp.eq.s32.totalorder %s29, 1
      %p181 = por %p179, %p180
      %p183 = scmp.ne.s32.totalorder %s166, %s182
      %p184 = scmp.eq.s32.totalorder %s29, 0
      %p185 = por %p183, %p184
      %p186 = scmp.le.s32.totalorder 1, %s23
      %p187 = scmp.lt.s32.totalorder %s23, 3
      %p188 = pnand %p186, %p187
      %p189 = pneg %p188
      // Predicated region
      $region9: #{tpu_custom_call.1} parent=5 // pred_check
        _
      $region10: #{tpu_custom_call.1} parent=5 // pred_check_branch
        %191 = sbr.rel (%p188) target = $region12
      $region11: #{tpu_custom_call.1} parent=5 // pred_region
        %s192 = ssub.s32 %s23, 1
        // Predicated region
        $region13: #{tpu_custom_call.1} parent=11 // pred_check
          %p193 = pneg %p82
        $region14: #{tpu_custom_call.1} parent=11 // pred_check_branch
          %195 = sbr.rel (%p193) target = $region16
        $region15: #{tpu_custom_call.1} parent=11 // pred_region
          %s197 = ssub.s32 6144, 6144
          %198 = vsyncadd [#allocation8], %s197
          %s199 = sshll.u32 [#allocation7], 4
          %s200 = int_to_ptr.vmem [resolvable:$true] %s199
          %205 = dma.hbm_to_vmem [thread:$0]  %s1, 6144, %s200, [#allocation8], 64, 64, 4
        $region16: #{tpu_custom_call.1} parent=11 // pred_fallthru
          _
        // Predicated region
        $region17: #{tpu_custom_call.1} parent=11 // pred_check
          %p206 = pneg %p103
        $region18: #{tpu_custom_call.1} parent=11 // pred_check_branch
          %208 = sbr.rel (%p206) target = $region20
        $region19: #{tpu_custom_call.1} parent=11 // pred_region
          %s210 = ssub.s32 1024, 1024
          %211 = vsyncadd [#allocation8], %s210
          %s212 = sshll.u32 [#allocation9], 4
          %s213 = int_to_ptr.vmem [resolvable:$true] %s212
          %218 = dma.hbm_to_vmem [thread:$0]  %s2, 1024, %s213, [#allocation8], 64, 64, 4
        $region20: #{tpu_custom_call.1} parent=11 // pred_fallthru
          _
        // Predicated region
        $region21: #{tpu_custom_call.1} parent=11 // pred_check
          %p219 = pneg %p124
        $region22: #{tpu_custom_call.1} parent=11 // pred_check_branch
          %221 = sbr.rel (%p219) target = $region24
        $region23: #{tpu_custom_call.1} parent=11 // pred_region
          %s223 = ssub.s32 1024, 1024
          %224 = vsyncadd [#allocation11], %s223
          %s225 = sshll.u32 [#allocation10], 4
          %s226 = int_to_ptr.vmem [resolvable:$true] %s225
          %231 = dma.hbm_to_vmem [thread:$0]  %s3, 1024, %s226, [#allocation11], 64, 64, 4
        $region24: #{tpu_custom_call.1} parent=11 // pred_fallthru
          _
      $region12: #{tpu_custom_call.1} parent=5 // pred_fallthru
        _
      %p232 = scmp.lt.s32.totalorder %s23, 2
      // Predicated region
      $region25: #{tpu_custom_call.1} parent=5 // pred_check
        %p233 = pneg %p232
      $region26: #{tpu_custom_call.1} parent=5 // pred_check_branch
        %235 = sbr.rel (%p233) target = $region28
      $region27: #{tpu_custom_call.1} parent=5 // pred_region
        // Predicated region
        $region29: #{tpu_custom_call.1} parent=27 // pred_check
          %p236 = pneg %p55
        $region30: #{tpu_custom_call.1} parent=27 // pred_check_branch
          %238 = sbr.rel (%p236) target = $region32
        $region31: #{tpu_custom_call.1} parent=27 // pred_region
          %s239 = sand.u32 %s45, 1
          %s240 = scalar_lea.sflag [#allocation5], %s239
          %s241 = sand.u32 %s45, 1
          %s242 = smul.addr %s241, 384
          %s243 = scalar_lea.vmem [#allocation4], %s242
          %s245 = ssub.s32 6144, 6144
          %246 = vsyncadd %s240, %s245
          %s247 = smul.addr %s30, 96
          %s248 = smul.addr %s247, 64
          %s249 = scalar_lea.hbm %s0, %s248
          %s250 = sshll.u32 %s243, 4
          %s251 = int_to_ptr.vmem [resolvable:$true] %s250
          %256 = dma.hbm_to_vmem [thread:$0]  %s249, 6144, %s251, %s240, 384, 384, 24
        $region32: #{tpu_custom_call.1} parent=27 // pred_fallthru
          _
      $region28: #{tpu_custom_call.1} parent=5 // pred_fallthru
        _
      %p257 = scmp.le.s32.totalorder 1, %s23
      %p258 = scmp.lt.s32.totalorder %s23, 3
      %p259 = pnand %p257, %p258
      %p260 = pneg %p259
      // Predicated region
      $region33: #{tpu_custom_call.1} parent=5 // pred_check
        _
      $region34: #{tpu_custom_call.1} parent=5 // pred_check_branch
        %262 = sbr.rel (%p259) target = $region36
      $region35: #{tpu_custom_call.1} parent=5 // pred_region
        %s263 = ssub.s32 %s23, 1
        %s264 = sand.u32 %s48, 1
        %s265 = scalar_lea.sflag [#allocation5], %s264
        %s266 = sand.u32 %s48, 1
        %s267 = smul.addr %s266, 384
        %s268 = scalar_lea.vmem [#allocation4], %s267
        // Predicated region
        $region37: #{tpu_custom_call.1} parent=35 // pred_check
          %p269 = pneg %p61
        $region38: #{tpu_custom_call.1} parent=35 // pred_check_branch
          %271 = sbr.rel (%p269) target = $region40
        $region39: #{tpu_custom_call.1} parent=35 // pred_region
          %272 = dma.done %s265, 6144
        $region40: #{tpu_custom_call.1} parent=35 // pred_fallthru
          _
        // Predicated region
        $region41: #{tpu_custom_call.1} parent=35 // pred_check
          %p273 = pneg %p82
        $region42: #{tpu_custom_call.1} parent=35 // pred_check_branch
          %275 = sbr.rel (%p273) target = $region44
        $region43: #{tpu_custom_call.1} parent=35 // pred_region
          %276 = dma.done [#allocation8], 6144
        $region44: #{tpu_custom_call.1} parent=35 // pred_fallthru
          _
        // Predicated region
        $region45: #{tpu_custom_call.1} parent=35 // pred_check
          %p277 = pneg %p103
        $region46: #{tpu_custom_call.1} parent=35 // pred_check_branch
          %279 = sbr.rel (%p277) target = $region48
        $region47: #{tpu_custom_call.1} parent=35 // pred_region
          %280 = dma.done [#allocation8], 1024
        $region48: #{tpu_custom_call.1} parent=35 // pred_fallthru
          _
        // Predicated region
        $region49: #{tpu_custom_call.1} parent=35 // pred_check
          %p281 = pneg %p124
        $region50: #{tpu_custom_call.1} parent=35 // pred_check_branch
          %283 = sbr.rel (%p281) target = $region52
        $region51: #{tpu_custom_call.1} parent=35 // pred_region
          %284 = dma.done [#allocation11], 1024
        $region52: #{tpu_custom_call.1} parent=35 // pred_fallthru
          _
        %s285 = sand.u32 %s48, 1
        %s286 = scalar_lea.sflag [#allocation5], %s285
        %s287 = sand.u32 %s48, 1
        %s288 = smul.addr %s287, 384
        %s289 = scalar_lea.vmem [#allocation4], %s288
        %p290 = pneg %p61
        %p291 = pneg %p58
        %p292 = pneg %p82
        %p293 = pneg %p79
        %p294 = pneg %p103
        %p295 = pneg %p100
        %p296 = pneg %p124
        %p297 = pneg %p121
        %p298 = pneg %p150
        %p299 = pneg %p147
        %s300 = sand.u32 %s137, 1
        %s301 = scalar_lea.sflag [#allocation6], %s300
        %s302 = sand.u32 %s137, 1
        %s303 = smul.addr %s302, 64
        %s304 = scalar_lea.vmem [#allocation12], %s303
        %p305 = pneg %p178
        %p306 = pneg %p175
        %s307 = sand.u32 %s165, 1
        %s308 = scalar_lea.sflag [#allocation14], %s307
        %s309 = sand.u32 %s165, 1
        %s310 = smul.addr %s309, 64
        %s311 = scalar_lea.vmem [#allocation13], %s310
        %s312 = smul.u32 16, %s33
        %p314 = scmp.eq.s32.totalorder %s33, 0
        // Predicated region
        $region53: #{tpu_custom_call.1} parent=35 // pred_check
          %p315 = pneg %p314
        $region54: #{tpu_custom_call.1} parent=35 // pred_check_branch
          %317 = sbr.rel (%p315) target = $region56
        $region55: #{tpu_custom_call.1} parent=35 // pred_region
          %s318 = smul.u32 0, 6
          %s319 = smul.addr %s318, 4
          %s320 = scalar_lea.vmem %s268, %s319 [#allocation4]
          %v321 = vld [vmem:[%s320] sm:$0xff]
          %v322 = vld [vmem:[%s320 + $0x8] sm:$0xff]
          %v323 = vld [vmem:[%s320 + $0x10] sm:$0xff]
          %v324 = vld [vmem:[%s320 + $0x18] sm:$0xff]
          %v325 = vld [vmem:[%s320 + $0x20] sm:$0xff]
          %v326 = vld [vmem:[%s320 + $0x28] sm:$0xff]
          %v327 = vld [vmem:[%s320 + $0x30] sm:$0xff]
          %v328 = vld [vmem:[%s320 + $0x38] sm:$0xff]
          %v329 = vld [vmem:[%s320 + $0x40] sm:$0xff]
          %v330 = vld [vmem:[%s320 + $0x48] sm:$0xff]
          %v331 = vld [vmem:[%s320 + $0x50] sm:$0xff]
          %v332 = vld [vmem:[%s320 + $0x58] sm:$0xff]
          %v333 = vld [vmem:[%s320 + $0x60] sm:$0xff]
          %v334 = vld [vmem:[%s320 + $0x68] sm:$0xff]
          %v335 = vld [vmem:[%s320 + $0x70] sm:$0xff]
          %v336 = vld [vmem:[%s320 + $0x78] sm:$0xff]
          %v337 = vld [vmem:[%s320 + $0x80] sm:$0xff]
          %v338 = vld [vmem:[%s320 + $0x88] sm:$0xff]
          %v339 = vld [vmem:[%s320 + $0x90] sm:$0xff]
          %v340 = vld [vmem:[%s320 + $0x98] sm:$0xff]
          %v341 = vld [vmem:[%s320 + $0xa0] sm:$0xff]
          %v342 = vld [vmem:[%s320 + $0xa8] sm:$0xff]
          %v343 = vld [vmem:[%s320 + $0xb0] sm:$0xff]
          %v344 = vld [vmem:[%s320 + $0xb8] sm:$0xff]
          %v345 = vld [vmem:[%s320 + $0xc0] sm:$0xff]
          %v346 = vld [vmem:[%s320 + $0xc8] sm:$0xff]
          %v347 = vld [vmem:[%s320 + $0xd0] sm:$0xff]
          %v348 = vld [vmem:[%s320 + $0xd8] sm:$0xff]
          %v349 = vld [vmem:[%s320 + $0xe0] sm:$0xff]
          %v350 = vld [vmem:[%s320 + $0xe8] sm:$0xff]
          %v351 = vld [vmem:[%s320 + $0xf0] sm:$0xff]
          %v352 = vld [vmem:[%s320 + $0xf8] sm:$0xff]
          %v353 = vld [vmem:[%s320 + $0x100] sm:$0xff]
          %v354 = vld [vmem:[%s320 + $0x108] sm:$0xff]
          %v355 = vld [vmem:[%s320 + $0x110] sm:$0xff]
          %v356 = vld [vmem:[%s320 + $0x118] sm:$0xff]
          %v357 = vld [vmem:[%s320 + $0x120] sm:$0xff]
          %v358 = vld [vmem:[%s320 + $0x128] sm:$0xff]
          %v359 = vld [vmem:[%s320 + $0x130] sm:$0xff]
          %v360 = vld [vmem:[%s320 + $0x138] sm:$0xff]
          %v361 = vld [vmem:[%s320 + $0x140] sm:$0xff]
          %v362 = vld [vmem:[%s320 + $0x148] sm:$0xff]
          %v363 = vld [vmem:[%s320 + $0x150] sm:$0xff]
          %v364 = vld [vmem:[%s320 + $0x158] sm:$0xff]
          %v365 = vld [vmem:[%s320 + $0x160] sm:$0xff]
          %v366 = vld [vmem:[%s320 + $0x168] sm:$0xff]
          %v367 = vld [vmem:[%s320 + $0x170] sm:$0xff]
          %v368 = vld [vmem:[%s320 + $0x178] sm:$0xff]
          %v369 = vld [vmem:[#allocation7] sm:$0xf]
          %v370 = vld [vmem:[#allocation7 + $0x4] sm:$0xf]
          %v371 = vld [vmem:[#allocation7 + $0x8] sm:$0xf]
          %v372 = vld [vmem:[#allocation7 + $0xc] sm:$0xf]
          %v373 = vld [vmem:[#allocation7 + $0x10] sm:$0xf]
          %v374 = vld [vmem:[#allocation7 + $0x14] sm:$0xf]
          %v375 = vld [vmem:[#allocation7 + $0x18] sm:$0xf]
          %v376 = vld [vmem:[#allocation7 + $0x1c] sm:$0xf]
          %v377 = vld [vmem:[#allocation7 + $0x20] sm:$0xf]
          %v378 = vld [vmem:[#allocation7 + $0x24] sm:$0xf]
          %v379 = vld [vmem:[#allocation7 + $0x28] sm:$0xf]
          %v380 = vld [vmem:[#allocation7 + $0x2c] sm:$0xf]
          %v381 = vld [vmem:[#allocation7 + $0x30] sm:$0xf]
          %v382 = vld [vmem:[#allocation7 + $0x34] sm:$0xf]
          %v383 = vld [vmem:[#allocation7 + $0x38] sm:$0xf]
          %v384 = vld [vmem:[#allocation7 + $0x3c] sm:$0xf]
          %v385 = vld [vmem:[#allocation7 + $0x40] sm:$0xf]
          %v386 = vld [vmem:[#allocation7 + $0x44] sm:$0xf]
          %v387 = vld [vmem:[#allocation7 + $0x48] sm:$0xf]
          %v388 = vld [vmem:[#allocation7 + $0x4c] sm:$0xf]
          %v389 = vld [vmem:[#allocation7 + $0x50] sm:$0xf]
          %v390 = vld [vmem:[#allocation7 + $0x54] sm:$0xf]
          %v391 = vld [vmem:[#allocation7 + $0x58] sm:$0xf]
          %v392 = vld [vmem:[#allocation7 + $0x5c] sm:$0xf]
          %v393 = vld [vmem:[#allocation7 + $0x60] sm:$0xf]
          %v394 = vld [vmem:[#allocation7 + $0x64] sm:$0xf]
          %v395 = vld [vmem:[#allocation7 + $0x68] sm:$0xf]
          %v396 = vld [vmem:[#allocation7 + $0x6c] sm:$0xf]
          %v397 = vld [vmem:[#allocation7 + $0x70] sm:$0xf]
          %v398 = vld [vmem:[#allocation7 + $0x74] sm:$0xf]
          %v399 = vld [vmem:[#allocation7 + $0x78] sm:$0xf]
          %v400 = vld [vmem:[#allocation7 + $0x7c] sm:$0xf]
          %v401 = vld [vmem:[#allocation7 + $0x80] sm:$0xf]
          %v402 = vld [vmem:[#allocation7 + $0x84] sm:$0xf]
          %v403 = vld [vmem:[#allocation7 + $0x88] sm:$0xf]
          %v404 = vld [vmem:[#allocation7 + $0x8c] sm:$0xf]
          %v405 = vld [vmem:[#allocation7 + $0x90] sm:$0xf]
          %v406 = vld [vmem:[#allocation7 + $0x94] sm:$0xf]
          %v407 = vld [vmem:[#allocation7 + $0x98] sm:$0xf]
          %v408 = vld [vmem:[#allocation7 + $0x9c] sm:$0xf]
          %v409 = vld [vmem:[#allocation7 + $0xa0] sm:$0xf]
          %v410 = vld [vmem:[#allocation7 + $0xa4] sm:$0xf]
          %v411 = vld [vmem:[#allocation7 + $0xa8] sm:$0xf]
          %v412 = vld [vmem:[#allocation7 + $0xac] sm:$0xf]
          %v413 = vld [vmem:[#allocation7 + $0xb0] sm:$0xf]
          %v414 = vld [vmem:[#allocation7 + $0xb4] sm:$0xf]
          %v415 = vld [vmem:[#allocation7 + $0xb8] sm:$0xf]
          %v416 = vld [vmem:[#allocation7 + $0xbc] sm:$0xf]
          %v417 = vld [vmem:[#allocation7 + $0xc0] sm:$0xf]
          %v418 = vld [vmem:[#allocation7 + $0xc4] sm:$0xf]
          %v419 = vld [vmem:[#allocation7 + $0xc8] sm:$0xf]
          %v420 = vld [vmem:[#allocation7 + $0xcc] sm:$0xf]
          %v421 = vld [vmem:[#allocation7 + $0xd0] sm:$0xf]
          %v422 = vld [vmem:[#allocation7 + $0xd4] sm:$0xf]
          %v423 = vld [vmem:[#allocation7 + $0xd8] sm:$0xf]
          %v424 = vld [vmem:[#allocation7 + $0xdc] sm:$0xf]
          %v425 = vld [vmem:[#allocation7 + $0xe0] sm:$0xf]
          %v426 = vld [vmem:[#allocation7 + $0xe4] sm:$0xf]
          %v427 = vld [vmem:[#allocation7 + $0xe8] sm:$0xf]
          %v428 = vld [vmem:[#allocation7 + $0xec] sm:$0xf]
          %v429 = vld [vmem:[#allocation7 + $0xf0] sm:$0xf]
          %v430 = vld [vmem:[#allocation7 + $0xf4] sm:$0xf]
          %v431 = vld [vmem:[#allocation7 + $0xf8] sm:$0xf]
          %v432 = vld [vmem:[#allocation7 + $0xfc] sm:$0xf]
          %v433 = vld [vmem:[#allocation7 + $0x100] sm:$0xf]
          %v434 = vld [vmem:[#allocation7 + $0x104] sm:$0xf]
          %v435 = vld [vmem:[#allocation7 + $0x108] sm:$0xf]
          %v436 = vld [vmem:[#allocation7 + $0x10c] sm:$0xf]
          %v437 = vld [vmem:[#allocation7 + $0x110] sm:$0xf]
          %v438 = vld [vmem:[#allocation7 + $0x114] sm:$0xf]
          %v439 = vld [vmem:[#allocation7 + $0x118] sm:$0xf]
          %v440 = vld [vmem:[#allocation7 + $0x11c] sm:$0xf]
          %v441 = vld [vmem:[#allocation7 + $0x120] sm:$0xf]
          %v442 = vld [vmem:[#allocation7 + $0x124] sm:$0xf]
          %v443 = vld [vmem:[#allocation7 + $0x128] sm:$0xf]
          %v444 = vld [vmem:[#allocation7 + $0x12c] sm:$0xf]
          %v445 = vld [vmem:[#allocation7 + $0x130] sm:$0xf]
          %v446 = vld [vmem:[#allocation7 + $0x134] sm:$0xf]
          %v447 = vld [vmem:[#allocation7 + $0x138] sm:$0xf]
          %v448 = vld [vmem:[#allocation7 + $0x13c] sm:$0xf]
          %v449 = vld [vmem:[#allocation7 + $0x140] sm:$0xf]
          %v450 = vld [vmem:[#allocation7 + $0x144] sm:$0xf]
          %v451 = vld [vmem:[#allocation7 + $0x148] sm:$0xf]
          %v452 = vld [vmem:[#allocation7 + $0x14c] sm:$0xf]
          %v453 = vld [vmem:[#allocation7 + $0x150] sm:$0xf]
          %v454 = vld [vmem:[#allocation7 + $0x154] sm:$0xf]
          %v455 = vld [vmem:[#allocation7 + $0x158] sm:$0xf]
          %v456 = vld [vmem:[#allocation7 + $0x15c] sm:$0xf]
          %v457 = vld [vmem:[#allocation7 + $0x160] sm:$0xf]
          %v458 = vld [vmem:[#allocation7 + $0x164] sm:$0xf]
          %v459 = vld [vmem:[#allocation7 + $0x168] sm:$0xf]
          %v460 = vld [vmem:[#allocation7 + $0x16c] sm:$0xf]
          %v461 = vld [vmem:[#allocation7 + $0x170] sm:$0xf]
          %v462 = vld [vmem:[#allocation7 + $0x174] sm:$0xf]
          %v463 = vld [vmem:[#allocation7 + $0x178] sm:$0xf]
          %v464 = vld [vmem:[#allocation7 + $0x17c] sm:$0xf]
          %v513 = vunpack.c.l.b16 %v321
          %v514 = vunpack.c.h.b16 %v321
          %v515 = vunpack.c.l.b16 %v322
          %v516 = vunpack.c.h.b16 %v322
          %v517 = vunpack.c.l.b16 %v323
          %v518 = vunpack.c.h.b16 %v323
          %v519 = vunpack.c.l.b16 %v324
          %v520 = vunpack.c.h.b16 %v324
          %v521 = vunpack.c.l.b16 %v325
          %v522 = vunpack.c.h.b16 %v325
          %v523 = vunpack.c.l.b16 %v326
          %v524 = vunpack.c.h.b16 %v326
          %v525 = vunpack.c.l.b16 %v327
          %v526 = vunpack.c.h.b16 %v327
          %v527 = vunpack.c.l.b16 %v328
          %v528 = vunpack.c.h.b16 %v328
          %v529 = vunpack.c.l.b16 %v329
          %v530 = vunpack.c.h.b16 %v329
          %v531 = vunpack.c.l.b16 %v330
          %v532 = vunpack.c.h.b16 %v330
          %v533 = vunpack.c.l.b16 %v331
          %v534 = vunpack.c.h.b16 %v331
          %v535 = vunpack.c.l.b16 %v332
          %v536 = vunpack.c.h.b16 %v332
          %v537 = vunpack.c.l.b16 %v333
          %v538 = vunpack.c.h.b16 %v333
          %v539 = vunpack.c.l.b16 %v334
          %v540 = vunpack.c.h.b16 %v334
          %v541 = vunpack.c.l.b16 %v335
          %v542 = vunpack.c.h.b16 %v335
          %v543 = vunpack.c.l.b16 %v336
          %v544 = vunpack.c.h.b16 %v336
          %v545 = vunpack.c.l.b16 %v337
          %v546 = vunpack.c.h.b16 %v337
          %v547 = vunpack.c.l.b16 %v338
          %v548 = vunpack.c.h.b16 %v338
          %v549 = vunpack.c.l.b16 %v339
          %v550 = vunpack.c.h.b16 %v339
          %v551 = vunpack.c.l.b16 %v340
          %v552 = vunpack.c.h.b16 %v340
          %v553 = vunpack.c.l.b16 %v341
          %v554 = vunpack.c.h.b16 %v341
          %v555 = vunpack.c.l.b16 %v342
          %v556 = vunpack.c.h.b16 %v342
          %v557 = vunpack.c.l.b16 %v343
          %v558 = vunpack.c.h.b16 %v343
          %v559 = vunpack.c.l.b16 %v344
          %v560 = vunpack.c.h.b16 %v344
          %v561 = vunpack.c.l.b16 %v345
          %v562 = vunpack.c.h.b16 %v345
          %v563 = vunpack.c.l.b16 %v346
          %v564 = vunpack.c.h.b16 %v346
          %v565 = vunpack.c.l.b16 %v347
          %v566 = vunpack.c.h.b16 %v347
          %v567 = vunpack.c.l.b16 %v348
          %v568 = vunpack.c.h.b16 %v348
          %v569 = vunpack.c.l.b16 %v349
          %v570 = vunpack.c.h.b16 %v349
          %v571 = vunpack.c.l.b16 %v350
          %v572 = vunpack.c.h.b16 %v350
          %v573 = vunpack.c.l.b16 %v351
          %v574 = vunpack.c.h.b16 %v351
          %v575 = vunpack.c.l.b16 %v352
          %v576 = vunpack.c.h.b16 %v352
          %v577 = vunpack.c.l.b16 %v353
          %v578 = vunpack.c.h.b16 %v353
          %v579 = vunpack.c.l.b16 %v354
          %v580 = vunpack.c.h.b16 %v354
          %v581 = vunpack.c.l.b16 %v355
          %v582 = vunpack.c.h.b16 %v355
          %v583 = vunpack.c.l.b16 %v356
          %v584 = vunpack.c.h.b16 %v356
          %v585 = vunpack.c.l.b16 %v357
          %v586 = vunpack.c.h.b16 %v357
          %v587 = vunpack.c.l.b16 %v358
          %v588 = vunpack.c.h.b16 %v358
          %v589 = vunpack.c.l.b16 %v359
          %v590 = vunpack.c.h.b16 %v359
          %v591 = vunpack.c.l.b16 %v360
          %v592 = vunpack.c.h.b16 %v360
          %v593 = vunpack.c.l.b16 %v361
          %v594 = vunpack.c.h.b16 %v361
          %v595 = vunpack.c.l.b16 %v362
          %v596 = vunpack.c.h.b16 %v362
          %v597 = vunpack.c.l.b16 %v363
          %v598 = vunpack.c.h.b16 %v363
          %v599 = vunpack.c.l.b16 %v364
          %v600 = vunpack.c.h.b16 %v364
          %v601 = vunpack.c.l.b16 %v365
          %v602 = vunpack.c.h.b16 %v365
          %v603 = vunpack.c.l.b16 %v366
          %v604 = vunpack.c.h.b16 %v366
          %v605 = vunpack.c.l.b16 %v367
          %v606 = vunpack.c.h.b16 %v367
          %v607 = vunpack.c.l.b16 %v368
          %v608 = vunpack.c.h.b16 %v368
          %v609 = vpack.c.b16 %v519, %v513
          %v610 = vpack.c.b16 %v520, %v514
          %v611 = vpack.c.b16 %v521, %v515
          %v612 = vpack.c.b16 %v522, %v516
          %v613 = vpack.c.b16 %v523, %v517
          %v614 = vpack.c.b16 %v524, %v518
          %v615 = vpack.c.b16 %v531, %v525
          %v616 = vpack.c.b16 %v532, %v526
          %v617 = vpack.c.b16 %v533, %v527
          %v618 = vpack.c.b16 %v534, %v528
          %v619 = vpack.c.b16 %v535, %v529
          %v620 = vpack.c.b16 %v536, %v530
          %v621 = vpack.c.b16 %v543, %v537
          %v622 = vpack.c.b16 %v544, %v538
          %v623 = vpack.c.b16 %v545, %v539
          %v624 = vpack.c.b16 %v546, %v540
          %v625 = vpack.c.b16 %v547, %v541
          %v626 = vpack.c.b16 %v548, %v542
          %v627 = vpack.c.b16 %v555, %v549
          %v628 = vpack.c.b16 %v556, %v550
          %v629 = vpack.c.b16 %v557, %v551
          %v630 = vpack.c.b16 %v558, %v552
          %v631 = vpack.c.b16 %v559, %v553
          %v632 = vpack.c.b16 %v560, %v554
          %v633 = vpack.c.b16 %v567, %v561
          %v634 = vpack.c.b16 %v568, %v562
          %v635 = vpack.c.b16 %v569, %v563
          %v636 = vpack.c.b16 %v570, %v564
          %v637 = vpack.c.b16 %v571, %v565
          %v638 = vpack.c.b16 %v572, %v566
          %v639 = vpack.c.b16 %v579, %v573
          %v640 = vpack.c.b16 %v580, %v574
          %v641 = vpack.c.b16 %v581, %v575
          %v642 = vpack.c.b16 %v582, %v576
          %v643 = vpack.c.b16 %v583, %v577
          %v644 = vpack.c.b16 %v584, %v578
          %v645 = vpack.c.b16 %v591, %v585
          %v646 = vpack.c.b16 %v592, %v586
          %v647 = vpack.c.b16 %v593, %v587
          %v648 = vpack.c.b16 %v594, %v588
          %v649 = vpack.c.b16 %v595, %v589
          %v650 = vpack.c.b16 %v596, %v590
          %v651 = vpack.c.b16 %v603, %v597
          %v652 = vpack.c.b16 %v604, %v598
          %v653 = vpack.c.b16 %v605, %v599
          %v654 = vpack.c.b16 %v606, %v600
          %v655 = vpack.c.b16 %v607, %v601
          %v656 = vpack.c.b16 %v608, %v602
          %v801 = vunpack.c.l.b16 %v369
          %v802 = vunpack.c.l.b16 %v370
          %v803 = vunpack.c.l.b16 %v371
          %v804 = vunpack.c.l.b16 %v372
          %v805 = vunpack.c.l.b16 %v373
          %v806 = vunpack.c.l.b16 %v374
          %v807 = vunpack.c.l.b16 %v375
          %v808 = vunpack.c.l.b16 %v376
          %v809 = vunpack.c.l.b16 %v377
          %v810 = vunpack.c.l.b16 %v378
          %v811 = vunpack.c.l.b16 %v379
          %v812 = vunpack.c.l.b16 %v380
          %v813 = vunpack.c.l.b16 %v381
          %v814 = vunpack.c.l.b16 %v382
          %v815 = vunpack.c.l.b16 %v383
          %v816 = vunpack.c.l.b16 %v384
          %v817 = vunpack.c.l.b16 %v385
          %v818 = vunpack.c.l.b16 %v386
          %v819 = vunpack.c.l.b16 %v387
          %v820 = vunpack.c.l.b16 %v388
          %v821 = vunpack.c.l.b16 %v389
          %v822 = vunpack.c.l.b16 %v390
          %v823 = vunpack.c.l.b16 %v391
          %v824 = vunpack.c.l.b16 %v392
          %v825 = vunpack.c.l.b16 %v393
          %v826 = vunpack.c.l.b16 %v394
          %v827 = vunpack.c.l.b16 %v395
          %v828 = vunpack.c.l.b16 %v396
          %v829 = vunpack.c.l.b16 %v397
          %v830 = vunpack.c.l.b16 %v398
          %v831 = vunpack.c.l.b16 %v399
          %v832 = vunpack.c.l.b16 %v400
          %v833 = vunpack.c.l.b16 %v401
          %v834 = vunpack.c.l.b16 %v402
          %v835 = vunpack.c.l.b16 %v403
          %v836 = vunpack.c.l.b16 %v404
          %v837 = vunpack.c.l.b16 %v405
          %v838 = vunpack.c.l.b16 %v406
          %v839 = vunpack.c.l.b16 %v407
          %v840 = vunpack.c.l.b16 %v408
          %v841 = vunpack.c.l.b16 %v409
          %v842 = vunpack.c.l.b16 %v410
          %v843 = vunpack.c.l.b16 %v411
          %v844 = vunpack.c.l.b16 %v412
          %v845 = vunpack.c.l.b16 %v413
          %v846 = vunpack.c.l.b16 %v414
          %v847 = vunpack.c.l.b16 %v415
          %v848 = vunpack.c.l.b16 %v416
          %v849 = vunpack.c.l.b16 %v417
          %v850 = vunpack.c.l.b16 %v418
          %v851 = vunpack.c.l.b16 %v419
          %v852 = vunpack.c.l.b16 %v420
          %v853 = vunpack.c.l.b16 %v421
          %v854 = vunpack.c.l.b16 %v422
          %v855 = vunpack.c.l.b16 %v423
          %v856 = vunpack.c.l.b16 %v424
          %v857 = vunpack.c.l.b16 %v425
          %v858 = vunpack.c.l.b16 %v426
          %v859 = vunpack.c.l.b16 %v427
          %v860 = vunpack.c.l.b16 %v428
          %v861 = vunpack.c.l.b16 %v429
          %v862 = vunpack.c.l.b16 %v430
          %v863 = vunpack.c.l.b16 %v431
          %v864 = vunpack.c.l.b16 %v432
          %v865 = vunpack.c.l.b16 %v433
          %v866 = vunpack.c.l.b16 %v434
          %v867 = vunpack.c.l.b16 %v435
          %v868 = vunpack.c.l.b16 %v436
          %v869 = vunpack.c.l.b16 %v437
          %v870 = vunpack.c.l.b16 %v438
          %v871 = vunpack.c.l.b16 %v439
          %v872 = vunpack.c.l.b16 %v440
          %v873 = vunpack.c.l.b16 %v441
          %v874 = vunpack.c.l.b16 %v442
          %v875 = vunpack.c.l.b16 %v443
          %v876 = vunpack.c.l.b16 %v444
          %v877 = vunpack.c.l.b16 %v445
          %v878 = vunpack.c.l.b16 %v446
          %v879 = vunpack.c.l.b16 %v447
          %v880 = vunpack.c.l.b16 %v448
          %v881 = vunpack.c.l.b16 %v449
          %v882 = vunpack.c.l.b16 %v450
          %v883 = vunpack.c.l.b16 %v451
          %v884 = vunpack.c.l.b16 %v452
          %v885 = vunpack.c.l.b16 %v453
          %v886 = vunpack.c.l.b16 %v454
          %v887 = vunpack.c.l.b16 %v455
          %v888 = vunpack.c.l.b16 %v456
          %v889 = vunpack.c.l.b16 %v457
          %v890 = vunpack.c.l.b16 %v458
          %v891 = vunpack.c.l.b16 %v459
          %v892 = vunpack.c.l.b16 %v460
          %v893 = vunpack.c.l.b16 %v461
          %v894 = vunpack.c.l.b16 %v462
          %v895 = vunpack.c.l.b16 %v463
          %v896 = vunpack.c.l.b16 %v464
          %v897 = vpack.c.b16 %v802, %v801
          %v898 = vpack.c.b16 %v804, %v803
          %v899 = vpack.c.b16 %v806, %v805
          %v900 = vpack.c.b16 %v808, %v807
          %v901 = vpack.c.b16 %v810, %v809
          %v902 = vpack.c.b16 %v812, %v811
          %v903 = vpack.c.b16 %v814, %v813
          %v904 = vpack.c.b16 %v816, %v815
          %v905 = vpack.c.b16 %v818, %v817
          %v906 = vpack.c.b16 %v820, %v819
          %v907 = vpack.c.b16 %v822, %v821
          %v908 = vpack.c.b16 %v824, %v823
          %v909 = vpack.c.b16 %v826, %v825
          %v910 = vpack.c.b16 %v828, %v827
          %v911 = vpack.c.b16 %v830, %v829
          %v912 = vpack.c.b16 %v832, %v831
          %v913 = vpack.c.b16 %v834, %v833
          %v914 = vpack.c.b16 %v836, %v835
          %v915 = vpack.c.b16 %v838, %v837
          %v916 = vpack.c.b16 %v840, %v839
          %v917 = vpack.c.b16 %v842, %v841
          %v918 = vpack.c.b16 %v844, %v843
          %v919 = vpack.c.b16 %v846, %v845
          %v920 = vpack.c.b16 %v848, %v847
          %v921 = vpack.c.b16 %v850, %v849
          %v922 = vpack.c.b16 %v852, %v851
          %v923 = vpack.c.b16 %v854, %v853
          %v924 = vpack.c.b16 %v856, %v855
          %v925 = vpack.c.b16 %v858, %v857
          %v926 = vpack.c.b16 %v860, %v859
          %v927 = vpack.c.b16 %v862, %v861
          %v928 = vpack.c.b16 %v864, %v863
          %v929 = vpack.c.b16 %v866, %v865
          %v930 = vpack.c.b16 %v868, %v867
          %v931 = vpack.c.b16 %v870, %v869
          %v932 = vpack.c.b16 %v872, %v871
          %v933 = vpack.c.b16 %v874, %v873
          %v934 = vpack.c.b16 %v876, %v875
          %v935 = vpack.c.b16 %v878, %v877
          %v936 = vpack.c.b16 %v880, %v879
          %v937 = vpack.c.b16 %v882, %v881
          %v938 = vpack.c.b16 %v884, %v883
          %v939 = vpack.c.b16 %v886, %v885
          %v940 = vpack.c.b16 %v888, %v887
          %v941 = vpack.c.b16 %v890, %v889
          %v942 = vpack.c.b16 %v892, %v891
          %v943 = vpack.c.b16 %v894, %v893
          %v944 = vpack.c.b16 %v896, %v895
          %993 = vmatprep.subr.bf16.mxu0 0
          %994 = vmatpush1.bf16.msra.mxu0 %v897
          %995 = vmatprep.subr.bf16.mxu0 0
          %996 = vmatpush1.bf16.msra.mxu0 %v898
          %997 = vmatprep.subr.bf16.mxu0 0
          %998 = vmatpush1.bf16.msra.mxu0 %v899
          %999 = vmatprep.subr.bf16.mxu0 0
          %1000 = vmatpush1.bf16.msra.mxu0 %v900
          %1001 = vmatprep.subr.bf16.mxu0 0
          %1002 = vmatpush1.bf16.msra.mxu0 %v901
          %1003 = vmatprep.subr.bf16.mxu0 0
          %1004 = vmatpush1.bf16.msra.mxu0 %v902
          %1005 = vmatprep.subr.bf16.mxu0 0
          %1006 = vmatpush1.bf16.msra.mxu0 %v903
          %1007 = vmatprep.subr.bf16.mxu0 0
          %1008 = vmatpush1.bf16.msra.mxu0 %v904
          %1009 = vmatprep.subr.bf16.mxu0 0
          %1010 = vmatpush1.bf16.msra.mxu0 %v905
          %1011 = vmatprep.subr.bf16.mxu0 0
          %1012 = vmatpush1.bf16.msra.mxu0 %v906
          %1013 = vmatprep.subr.bf16.mxu0 0
          %1014 = vmatpush1.bf16.msra.mxu0 %v907
          %1015 = vmatprep.subr.bf16.mxu0 0
          %1016 = vmatpush1.bf16.msra.mxu0 %v908
          %1017 = vmatprep.subr.bf16.mxu0 0
          %1018 = vmatpush1.bf16.msra.mxu0 %v909
          %1019 = vmatprep.subr.bf16.mxu0 0
          %1020 = vmatpush1.bf16.msra.mxu0 %v910
          %1021 = vmatprep.subr.bf16.mxu0 0
          %1022 = vmatpush1.bf16.msra.mxu0 %v911
          %1023 = vmatprep.subr.bf16.mxu0 0
          %1024 = vmatpush1.bf16.msra.mxu0 %v912
          %1025 = vmatprep.mubr.bf16.mxu0 %v610
          %1026 = vmatmul.mubr.bf16.gmra.mrb[0].mxu0 %v609
          %v1027 = vpop.f32.mrb[0].mxu0
          %v1028 = vadd.f32 0.0, %v1027
          %v1029 = vpop.f32.mrb[0].mxu0
          %v1030 = vpop.f32.mrb[0].mxu0
          %v1031 = vadd.f32 0.0, %v1030
          %v1032 = vpop.f32.mrb[0].mxu0
          %1033 = vmatprep.mubr.bf16.mxu0 %v616
          %1034 = vmatmul.mubr.bf16.gmra.mrb[0].mxu0 %v615
          %v1035 = vpop.f32.mrb[0].mxu0
          %v1036 = vadd.f32 0.0, %v1035
          %v1037 = vpop.f32.mrb[0].mxu0
          %v1038 = vpop.f32.mrb[0].mxu0
          %v1039 = vadd.f32 0.0, %v1038
          %v1040 = vpop.f32.mrb[0].mxu0
          %1041 = vmatprep.mubr.bf16.mxu0 %v622
          %1042 = vmatmul.mubr.bf16.gmra.mrb[0].mxu0 %v621
          %v1043 = vpop.f32.mrb[0].mxu0
          %v1044 = vadd.f32 0.0, %v1043
          %v1045 = vpop.f32.mrb[0].mxu0
          %v1046 = vpop.f32.mrb[0].mxu0
          %v1047 = vadd.f32 0.0, %v1046
          %v1048 = vpop.f32.mrb[0].mxu0
          %1049 = vmatprep.mubr.bf16.mxu0 %v628
          %1050 = vmatmul.mubr.bf16.gmra.mrb[0].mxu0 %v627
          %v1051 = vpop.f32.mrb[0].mxu0
          %v1052 = vadd.f32 0.0, %v1051
          %v1053 = vpop.f32.mrb[0].mxu0
          %v1054 = vpop.f32.mrb[0].mxu0
          %v1055 = vadd.f32 0.0, %v1054
          %v1056 = vpop.f32.mrb[0].mxu0
          %1057 = vmatprep.mubr.bf16.mxu0 %v634
          %1058 = vmatmul.mubr.bf16.gmra.mrb[0].mxu0 %v633
          %v1059 = vpop.f32.mrb[0].mxu0
          %v1060 = vadd.f32 0.0, %v1059
          %v1061 = vpop.f32.mrb[0].mxu0
          %v1062 = vpop.f32.mrb[0].mxu0
          %v1063 = vadd.f32 0.0, %v1062
          %v1064 = vpop.f32.mrb[0].mxu0
          %1065 = vmatprep.mubr.bf16.mxu0 %v640
          %1066 = vmatmul.mubr.bf16.gmra.mrb[0].mxu0 %v639
          %v1067 = vpop.f32.mrb[0].mxu0
          %v1068 = vadd.f32 0.0, %v1067
          %v1069 = vpop.f32.mrb[0].mxu0
          %v1070 = vpop.f32.mrb[0].mxu0
          %v1071 = vadd.f32 0.0, %v1070
          %v1072 = vpop.f32.mrb[0].mxu0
          %1073 = vmatprep.mubr.bf16.mxu0 %v646
          %1074 = vmatmul.mubr.bf16.gmra.mrb[0].mxu0 %v645
          %v1075 = vpop.f32.mrb[0].mxu0
          %v1076 = vadd.f32 0.0, %v1075
          %v1077 = vpop.f32.mrb[0].mxu0
          %v1078 = vpop.f32.mrb[0].mxu0
          %v1079 = vadd.f32 0.0, %v1078
          %v1080 = vpop.f32.mrb[0].mxu0
          %1081 = vmatprep.mubr.bf16.mxu0 %v652
          %1082 = vmatmul.mubr.bf16.gmra.mrb[0].mxu0 %v651
          %v1083 = vpop.f32.mrb[0].mxu0
          %v1084 = vadd.f32 0.0, %v1083
          %v1085 = vpop.f32.mrb[0].mxu0
          %v1086 = vpop.f32.mrb[0].mxu0
          %v1087 = vadd.f32 0.0, %v1086
          %v1088 = vpop.f32.mrb[0].mxu0
          %1089 = vdwg.mxu0
          %1090 = vmatprep.subr.bf16.mxu0 0
          %1091 = vmatpush1.bf16.msra.mxu0 %v913
          %1092 = vmatprep.subr.bf16.mxu0 0
          %1093 = vmatpush1.bf16.msra.mxu0 %v914
          %1094 = vmatprep.subr.bf16.mxu0 0
          %1095 = vmatpush1.bf16.msra.mxu0 %v915
          %1096 = vmatprep.subr.bf16.mxu0 0
          %1097 = vmatpush1.bf16.msra.mxu0 %v916
          %1098 = vmatprep.subr.bf16.mxu0 0
          %1099 = vmatpush1.bf16.msra.mxu0 %v917
          %1100 = vmatprep.subr.bf16.mxu0 0
          %1101 = vmatpush1.bf16.msra.mxu0 %v918
          %1102 = vmatprep.subr.bf16.mxu0 0
          %1103 = vmatpush1.bf16.msra.mxu0 %v919
          %1104 = vmatprep.subr.bf16.mxu0 0
          %1105 = vmatpush1.bf16.msra.mxu0 %v920
          %1106 = vmatprep.subr.bf16.mxu0 0
          %1107 = vmatpush1.bf16.msra.mxu0 %v921
          %1108 = vmatprep.subr.bf16.mxu0 0
          %1109 = vmatpush1.bf16.msra.mxu0 %v922
          %1110 = vmatprep.subr.bf16.mxu0 0
          %1111 = vmatpush1.bf16.msra.mxu0 %v923
          %1112 = vmatprep.subr.bf16.mxu0 0
          %1113 = vmatpush1.bf16.msra.mxu0 %v924
          %1114 = vmatprep.subr.bf16.mxu0 0
          %1115 = vmatpush1.bf16.msra.mxu0 %v925
          %1116 = vmatprep.subr.bf16.mxu0 0
          %1117 = vmatpush1.bf16.msra.mxu0 %v926
          %1118 = vmatprep.subr.bf16.mxu0 0
          %1119 = vmatpush1.bf16.msra.mxu0 %v927
          %1120 = vmatprep.subr.bf16.mxu0 0
          %1121 = vmatpush1.bf16.msra.mxu0 %v928
          %1122 = vmatprep.mubr.bf16.mxu0 %v612
          %1123 = vmatmul.mubr.bf16.gmra.mrb[0].mxu0 %v611
          %v1124 = vpop.f32.mrb[0].mxu0
          %v1125 = vadd.f32 %v1028, %v1124
          %v1126 = vpop.f32.mrb[0].mxu0
          %v1127 = vpop.f32.mrb[0].mxu0
          %v1128 = vadd.f32 %v1031, %v1127
          %v1129 = vpop.f32.mrb[0].mxu0
          %1130 = vmatprep.mubr.bf16.mxu0 %v618
          %1131 = vmatmul.mubr.bf16.gmra.mrb[0].mxu0 %v617
          %v1132 = vpop.f32.mrb[0].mxu0
          %v1133 = vadd.f32 %v1036, %v1132
          %v1134 = vpop.f32.mrb[0].mxu0
          %v1135 = vpop.f32.mrb[0].mxu0
          %v1136 = vadd.f32 %v1039, %v1135
          %v1137 = vpop.f32.mrb[0].mxu0
          %1138 = vmatprep.mubr.bf16.mxu0 %v624
          %1139 = vmatmul.mubr.bf16.gmra.mrb[0].mxu0 %v623
          %v1140 = vpop.f32.mrb[0].mxu0
          %v1141 = vadd.f32 %v1044, %v1140
          %v1142 = vpop.f32.mrb[0].mxu0
          %v1143 = vpop.f32.mrb[0].mxu0
          %v1144 = vadd.f32 %v1047, %v1143
          %v1145 = vpop.f32.mrb[0].mxu0
          %1146 = vmatprep.mubr.bf16.mxu0 %v630
          %1147 = vmatmul.mubr.bf16.gmra.mrb[0].mxu0 %v629
          %v1148 = vpop.f32.mrb[0].mxu0
          %v1149 = vadd.f32 %v1052, %v1148
          %v1150 = vpop.f32.mrb[0].mxu0
          %v1151 = vpop.f32.mrb[0].mxu0
          %v1152 = vadd.f32 %v1055, %v1151
          %v1153 = vpop.f32.mrb[0].mxu0
          %1154 = vmatprep.mubr.bf16.mxu0 %v636
          %1155 = vmatmul.mubr.bf16.gmra.mrb[0].mxu0 %v635
          %v1156 = vpop.f32.mrb[0].mxu0
          %v1157 = vadd.f32 %v1060, %v1156
          %v1158 = vpop.f32.mrb[0].mxu0
          %v1159 = vpop.f32.mrb[0].mxu0
          %v1160 = vadd.f32 %v1063, %v1159
          %v1161 = vpop.f32.mrb[0].mxu0
          %1162 = vmatprep.mubr.bf16.mxu0 %v642
          %1163 = vmatmul.mubr.bf16.gmra.mrb[0].mxu0 %v641
          %v1164 = vpop.f32.mrb[0].mxu0
          %v1165 = vadd.f32 %v1068, %v1164
          %v1166 = vpop.f32.mrb[0].mxu0
          %v1167 = vpop.f32.mrb[0].mxu0
          %v1168 = vadd.f32 %v1071, %v1167
          %v1169 = vpop.f32.mrb[0].mxu0
          %1170 = vmatprep.mubr.bf16.mxu0 %v648
          %1171 = vmatmul.mubr.bf16.gmra.mrb[0].mxu0 %v647
          %v1172 = vpop.f32.mrb[0].mxu0
          %v1173 = vadd.f32 %v1076, %v1172
          %v1174 = vpop.f32.mrb[0].mxu0
          %v1175 = vpop.f32.mrb[0].mxu0
          %v1176 = vadd.f32 %v1079, %v1175
          %v1177 = vpop.f32.mrb[0].mxu0
          %1178 = vmatprep.mubr.bf16.mxu0 %v654
          %1179 = vmatmul.mubr.bf16.gmra.mrb[0].mxu0 %v653
          %v1180 = vpop.f32.mrb[0].mxu0
          %v1181 = vadd.f32 %v1084, %v1180
          %v1182 = vpop.f32.mrb[0].mxu0
          %v1183 = vpop.f32.mrb[0].mxu0
          %v1184 = vadd.f32 %v1087, %v1183
          %v1185 = vpop.f32.mrb[0].mxu0
          %1186 = vdwg.mxu0
          %1187 = vmatprep.subr.bf16.mxu0 0
          %1188 = vmatpush1.bf16.msra.mxu0 %v929
          %1189 = vmatprep.subr.bf16.mxu0 0
          %1190 = vmatpush1.bf16.msra.mxu0 %v930
          %1191 = vmatprep.subr.bf16.mxu0 0
          %1192 = vmatpush1.bf16.msra.mxu0 %v931
          %1193 = vmatprep.subr.bf16.mxu0 0
          %1194 = vmatpush1.bf16.msra.mxu0 %v932
          %1195 = vmatprep.subr.bf16.mxu0 0
          %1196 = vmatpush1.bf16.msra.mxu0 %v933
          %1197 = vmatprep.subr.bf16.mxu0 0
          %1198 = vmatpush1.bf16.msra.mxu0 %v934
          %1199 = vmatprep.subr.bf16.mxu0 0
          %1200 = vmatpush1.bf16.msra.mxu0 %v935
          %1201 = vmatprep.subr.bf16.mxu0 0
          %1202 = vmatpush1.bf16.msra.mxu0 %v936
          %1203 = vmatprep.subr.bf16.mxu0 0
          %1204 = vmatpush1.bf16.msra.mxu0 %v937
          %1205 = vmatprep.subr.bf16.mxu0 0
          %1206 = vmatpush1.bf16.msra.mxu0 %v938
          %1207 = vmatprep.subr.bf16.mxu0 0
          %1208 = vmatpush1.bf16.msra.mxu0 %v939
          %1209 = vmatprep.subr.bf16.mxu0 0
          %1210 = vmatpush1.bf16.msra.mxu0 %v940
          %1211 = vmatprep.subr.bf16.mxu0 0
          %1212 = vmatpush1.bf16.msra.mxu0 %v941
          %1213 = vmatprep.subr.bf16.mxu0 0
          %1214 = vmatpush1.bf16.msra.mxu0 %v942
          %1215 = vmatprep.subr.bf16.mxu0 0
          %1216 = vmatpush1.bf16.msra.mxu0 %v943
          %1217 = vmatprep.subr.bf16.mxu0 0
          %1218 = vmatpush1.bf16.msra.mxu0 %v944
          %1219 = vmatprep.mubr.bf16.mxu0 %v614
          %1220 = vmatmul.mubr.bf16.gmra.mrb[0].mxu0 %v613
          %v1221 = vpop.f32.mrb[0].mxu0
          %v1222 = vadd.f32 %v1125, %v1221
          %v1223 = vpop.f32.mrb[0].mxu0
          %v1224 = vpop.f32.mrb[0].mxu0
          %v1225 = vadd.f32 %v1128, %v1224
          %v1226 = vpop.f32.mrb[0].mxu0
          %1227 = vmatprep.mubr.bf16.mxu0 %v620
          %1228 = vmatmul.mubr.bf16.gmra.mrb[0].mxu0 %v619
          %v1229 = vpop.f32.mrb[0].mxu0
          %v1230 = vadd.f32 %v1133, %v1229
          %v1231 = vpop.f32.mrb[0].mxu0
          %v1232 = vpop.f32.mrb[0].mxu0
          %v1233 = vadd.f32 %v1136, %v1232
          %v1234 = vpop.f32.mrb[0].mxu0
          %1235 = vmatprep.mubr.bf16.mxu0 %v626
          %1236 = vmatmul.mubr.bf16.gmra.mrb[0].mxu0 %v625
          %v1237 = vpop.f32.mrb[0].mxu0
          %v1238 = vadd.f32 %v1141, %v1237
          %v1239 = vpop.f32.mrb[0].mxu0
          %v1240 = vpop.f32.mrb[0].mxu0
          %v1241 = vadd.f32 %v1144, %v1240
          %v1242 = vpop.f32.mrb[0].mxu0
          %1243 = vmatprep.mubr.bf16.mxu0 %v632
          %1244 = vmatmul.mubr.bf16.gmra.mrb[0].mxu0 %v631
          %v1245 = vpop.f32.mrb[0].mxu0
          %v1246 = vadd.f32 %v1149, %v1245
          %v1247 = vpop.f32.mrb[0].mxu0
          %v1248 = vpop.f32.mrb[0].mxu0
          %v1249 = vadd.f32 %v1152, %v1248
          %v1250 = vpop.f32.mrb[0].mxu0
          %1251 = vmatprep.mubr.bf16.mxu0 %v638
          %1252 = vmatmul.mubr.bf16.gmra.mrb[0].mxu0 %v637
          %v1253 = vpop.f32.mrb[0].mxu0
          %v1254 = vadd.f32 %v1157, %v1253
          %v1255 = vpop.f32.mrb[0].mxu0
          %v1256 = vpop.f32.mrb[0].mxu0
          %v1257 = vadd.f32 %v1160, %v1256
          %v1258 = vpop.f32.mrb[0].mxu0
          %1259 = vmatprep.mubr.bf16.mxu0 %v644
          %1260 = vmatmul.mubr.bf16.gmra.mrb[0].mxu0 %v643
          %v1261 = vpop.f32.mrb[0].mxu0
          %v1262 = vadd.f32 %v1165, %v1261
          %v1263 = vpop.f32.mrb[0].mxu0
          %v1264 = vpop.f32.mrb[0].mxu0
          %v1265 = vadd.f32 %v1168, %v1264
          %v1266 = vpop.f32.mrb[0].mxu0
          %1267 = vmatprep.mubr.bf16.mxu0 %v650
          %1268 = vmatmul.mubr.bf16.gmra.mrb[0].mxu0 %v649
          %v1269 = vpop.f32.mrb[0].mxu0
          %v1270 = vadd.f32 %v1173, %v1269
          %v1271 = vpop.f32.mrb[0].mxu0
          %v1272 = vpop.f32.mrb[0].mxu0
          %v1273 = vadd.f32 %v1176, %v1272
          %v1274 = vpop.f32.mrb[0].mxu0
          %1275 = vmatprep.mubr.bf16.mxu0 %v656
          %1276 = vmatmul.mubr.bf16.gmra.mrb[0].mxu0 %v655
          %v1277 = vpop.f32.mrb[0].mxu0
          %v1278 = vadd.f32 %v1181, %v1277
          %v1279 = vpop.f32.mrb[0].mxu0
          %v1280 = vpop.f32.mrb[0].mxu0
          %v1281 = vadd.f32 %v1184, %v1280
          %v1282 = vpop.f32.mrb[0].mxu0
          %1283 = vdwg.mxu0
          %v1284 = vpack.c.bf16 %v1225, %v1222
          %v1285 = vpack.c.bf16 %v1233, %v1230
          %v1286 = vpack.c.bf16 %v1241, %v1238
          %v1287 = vpack.c.bf16 %v1249, %v1246
          %v1288 = vpack.c.bf16 %v1257, %v1254
          %v1289 = vpack.c.bf16 %v1265, %v1262
          %v1290 = vpack.c.bf16 %v1273, %v1270
          %v1291 = vpack.c.bf16 %v1281, %v1278
          %v1292 = vld [vmem:[#allocation9] sm:$0xf]
          %v1293 = vld [vmem:[#allocation9 + $0x4] sm:$0xf]
          %v1294 = vld [vmem:[#allocation9 + $0x8] sm:$0xf]
          %v1295 = vld [vmem:[#allocation9 + $0xc] sm:$0xf]
          %v1296 = vld [vmem:[#allocation9 + $0x10] sm:$0xf]
          %v1297 = vld [vmem:[#allocation9 + $0x14] sm:$0xf]
          %v1298 = vld [vmem:[#allocation9 + $0x18] sm:$0xf]
          %v1299 = vld [vmem:[#allocation9 + $0x1c] sm:$0xf]
          %v1300 = vld [vmem:[#allocation9 + $0x20] sm:$0xf]
          %v1301 = vld [vmem:[#allocation9 + $0x24] sm:$0xf]
          %v1302 = vld [vmem:[#allocation9 + $0x28] sm:$0xf]
          %v1303 = vld [vmem:[#allocation9 + $0x2c] sm:$0xf]
          %v1304 = vld [vmem:[#allocation9 + $0x30] sm:$0xf]
          %v1305 = vld [vmem:[#allocation9 + $0x34] sm:$0xf]
          %v1306 = vld [vmem:[#allocation9 + $0x38] sm:$0xf]
          %v1307 = vld [vmem:[#allocation9 + $0x3c] sm:$0xf]
          %v1324 = vunpack.c.l.b16 %v1292
          %v1325 = vunpack.c.l.b16 %v1293
          %v1326 = vunpack.c.l.b16 %v1294
          %v1327 = vunpack.c.l.b16 %v1295
          %v1328 = vunpack.c.l.b16 %v1296
          %v1329 = vunpack.c.l.b16 %v1297
          %v1330 = vunpack.c.l.b16 %v1298
          %v1331 = vunpack.c.l.b16 %v1299
          %v1332 = vunpack.c.l.b16 %v1300
          %v1333 = vunpack.c.l.b16 %v1301
          %v1334 = vunpack.c.l.b16 %v1302
          %v1335 = vunpack.c.l.b16 %v1303
          %v1336 = vunpack.c.l.b16 %v1304
          %v1337 = vunpack.c.l.b16 %v1305
          %v1338 = vunpack.c.l.b16 %v1306
          %v1339 = vunpack.c.l.b16 %v1307
          %v1340 = vpack.c.b16 %v1325, %v1324
          %v1341 = vpack.c.b16 %v1327, %v1326
          %v1342 = vpack.c.b16 %v1329, %v1328
          %v1343 = vpack.c.b16 %v1331, %v1330
          %v1344 = vpack.c.b16 %v1333, %v1332
          %v1345 = vpack.c.b16 %v1335, %v1334
          %v1346 = vpack.c.b16 %v1337, %v1336
          %v1347 = vpack.c.b16 %v1339, %v1338
          %1356 = vmatprep.subr.bf16.mxu0 0
          %1357 = vmatpush1.bf16.msra.mxu0 %v1340
          %1358 = vmatprep.subr.bf16.mxu0 0
          %1359 = vmatpush1.bf16.msra.mxu0 %v1341
          %1360 = vmatprep.subr.bf16.mxu0 0
          %1361 = vmatpush1.bf16.msra.mxu0 %v1342
          %1362 = vmatprep.subr.bf16.mxu0 0
          %1363 = vmatpush1.bf16.msra.mxu0 %v1343
          %1364 = vmatprep.subr.bf16.mxu0 0
          %1365 = vmatpush1.bf16.msra.mxu0 %v1344
          %1366 = vmatprep.subr.bf16.mxu0 0
          %1367 = vmatpush1.bf16.msra.mxu0 %v1345
          %1368 = vmatprep.subr.bf16.mxu0 0
          %1369 = vmatpush1.bf16.msra.mxu0 %v1346
          %1370 = vmatprep.subr.bf16.mxu0 0
          %1371 = vmatpush1.bf16.msra.mxu0 %v1347
          %1372 = vmatprep.subr.bf16.mxu0 0
          %1373 = vmatpush1.bf16.msra.mxu0 0
          %1374 = vmatprep.subr.bf16.mxu0 0
          %1375 = vmatpush1.bf16.msra.mxu0 0
          %1376 = vmatprep.subr.bf16.mxu0 0
          %1377 = vmatpush1.bf16.msra.mxu0 0
          %1378 = vmatprep.subr.bf16.mxu0 0
          %1379 = vmatpush1.bf16.msra.mxu0 0
          %1380 = vmatprep.subr.bf16.mxu0 0
          %1381 = vmatpush1.bf16.msra.mxu0 0
          %1382 = vmatprep.subr.bf16.mxu0 0
          %1383 = vmatpush1.bf16.msra.mxu0 0
          %1384 = vmatprep.subr.bf16.mxu0 0
          %1385 = vmatpush1.bf16.msra.mxu0 0
          %1386 = vmatprep.subr.bf16.mxu0 0
          %1387 = vmatpush1.bf16.msra.mxu0 0
          %1388 = vmatprep.mubr.bf16.mxu0 0
          %1389 = vmatmul.mubr.bf16.gmra.mrb[0].mxu0 %v1284
          %v1390 = vpop.f32.mrb[0].mxu0
          %v1391 = vadd.f32 0.0, %v1390
          %v1392 = vpop.f32.mrb[0].mxu0
          %v1393 = vpop.f32.mrb[0].mxu0
          %v1394 = vadd.f32 0.0, %v1393
          %v1395 = vpop.f32.mrb[0].mxu0
          %1396 = vmatprep.mubr.bf16.mxu0 0
          %1397 = vmatmul.mubr.bf16.gmra.mrb[0].mxu0 %v1285
          %v1398 = vpop.f32.mrb[0].mxu0
          %v1399 = vadd.f32 0.0, %v1398
          %v1400 = vpop.f32.mrb[0].mxu0
          %v1401 = vpop.f32.mrb[0].mxu0
          %v1402 = vadd.f32 0.0, %v1401
          %v1403 = vpop.f32.mrb[0].mxu0
          %1404 = vmatprep.mubr.bf16.mxu0 0
          %1405 = vmatmul.mubr.bf16.gmra.mrb[0].mxu0 %v1286
          %v1406 = vpop.f32.mrb[0].mxu0
          %v1407 = vadd.f32 0.0, %v1406
          %v1408 = vpop.f32.mrb[0].mxu0
          %v1409 = vpop.f32.mrb[0].mxu0
          %v1410 = vadd.f32 0.0, %v1409
          %v1411 = vpop.f32.mrb[0].mxu0
          %1412 = vmatprep.mubr.bf16.mxu0 0
          %1413 = vmatmul.mubr.bf16.gmra.mrb[0].mxu0 %v1287
          %v1414 = vpop.f32.mrb[0].mxu0
          %v1415 = vadd.f32 0.0, %v1414
          %v1416 = vpop.f32.mrb[0].mxu0
          %v1417 = vpop.f32.mrb[0].mxu0
          %v1418 = vadd.f32 0.0, %v1417
          %v1419 = vpop.f32.mrb[0].mxu0
          %1420 = vmatprep.mubr.bf16.mxu0 0
          %1421 = vmatmul.mubr.bf16.gmra.mrb[0].mxu0 %v1288
          %v1422 = vpop.f32.mrb[0].mxu0
          %v1423 = vadd.f32 0.0, %v1422
          %v1424 = vpop.f32.mrb[0].mxu0
          %v1425 = vpop.f32.mrb[0].mxu0
          %v1426 = vadd.f32 0.0, %v1425
          %v1427 = vpop.f32.mrb[0].mxu0
          %1428 = vmatprep.mubr.bf16.mxu0 0
          %1429 = vmatmul.mubr.bf16.gmra.mrb[0].mxu0 %v1289
          %v1430 = vpop.f32.mrb[0].mxu0
          %v1431 = vadd.f32 0.0, %v1430
          %v1432 = vpop.f32.mrb[0].mxu0
          %v1433 = vpop.f32.mrb[0].mxu0
          %v1434 = vadd.f32 0.0, %v1433
          %v1435 = vpop.f32.mrb[0].mxu0
          %1436 = vmatprep.mubr.bf16.mxu0 0
          %1437 = vmatmul.mubr.bf16.gmra.mrb[0].mxu0 %v1290
          %v1438 = vpop.f32.mrb[0].mxu0
          %v1439 = vadd.f32 0.0, %v1438
          %v1440 = vpop.f32.mrb[0].mxu0
          %v1441 = vpop.f32.mrb[0].mxu0
          %v1442 = vadd.f32 0.0, %v1441
          %v1443 = vpop.f32.mrb[0].mxu0
          %1444 = vmatprep.mubr.bf16.mxu0 0
          %1445 = vmatmul.mubr.bf16.gmra.mrb[0].mxu0 %v1291
          %v1446 = vpop.f32.mrb[0].mxu0
          %v1447 = vadd.f32 0.0, %v1446
          %v1448 = vpop.f32.mrb[0].mxu0
          %v1449 = vpop.f32.mrb[0].mxu0
          %v1450 = vadd.f32 0.0, %v1449
          %v1451 = vpop.f32.mrb[0].mxu0
          %1452 = vdwg.mxu0
          %v1453 = vpack.c.bf16 %v1394, %v1391
          %v1454 = vpack.c.bf16 %v1402, %v1399
          %v1455 = vpack.c.bf16 %v1410, %v1407
          %v1456 = vpack.c.bf16 %v1418, %v1415
          %v1457 = vpack.c.bf16 %v1426, %v1423
          %v1458 = vpack.c.bf16 %v1434, %v1431
          %v1459 = vpack.c.bf16 %v1442, %v1439
          %v1460 = vpack.c.bf16 %v1450, %v1447
          %1461 = vst [vmem:[#allocation2] sm:$0xff] %v1453
          %1462 = vst [vmem:[#allocation2 + $0x8] sm:$0xff] %v1454
          %1463 = vst [vmem:[#allocation2 + $0x10] sm:$0xff] %v1455
          %1464 = vst [vmem:[#allocation2 + $0x18] sm:$0xff] %v1456
          %1465 = vst [vmem:[#allocation2 + $0x20] sm:$0xff] %v1457
          %1466 = vst [vmem:[#allocation2 + $0x28] sm:$0xff] %v1458
          %1467 = vst [vmem:[#allocation2 + $0x30] sm:$0xff] %v1459
          %1468 = vst [vmem:[#allocation2 + $0x38] sm:$0xff] %v1460
          %1469 = vxpose.xlu0.b32.start [1/16] %v1391, 128
          %1470 = vxpose.xlu0.b32.cont [2/16] %v1394, 128
          %1471 = vxpose.xlu0.b32.cont [3/16] %v1399, 128
          %1472 = vxpose.xlu0.b32.cont [4/16] %v1402, 128
          %1473 = vxpose.xlu0.b32.cont [5/16] %v1407, 128
          %1474 = vxpose.xlu0.b32.cont [6/16] %v1410, 128
          %1475 = vxpose.xlu0.b32.cont [7/16] %v1415, 128
          %1476 = vxpose.xlu0.b32.cont [8/16] %v1418, 128
          %1477 = vxpose.xlu0.b32.cont [9/16] %v1423, 128
          %1478 = vxpose.xlu0.b32.cont [10/16] %v1426, 128
          %1479 = vxpose.xlu0.b32.cont [11/16] %v1431, 128
          %1480 = vxpose.xlu0.b32.cont [12/16] %v1434, 128
          %1481 = vxpose.xlu0.b32.cont [13/16] %v1439, 128
          %1482 = vxpose.xlu0.b32.cont [14/16] %v1442, 128
          %1483 = vxpose.xlu0.b32.cont [15/16] %v1447, 128
          %1484 = vxpose.xlu0.b32.end [16/16] %v1450, 128
          %v1485 = vpop.trf.xlu0
          %v1486 = vpop.trf.xlu0
          %v1487 = vpop.trf.xlu0
          %v1488 = vpop.trf.xlu0
          %v1489 = vpop.trf.xlu0
          %v1490 = vpop.trf.xlu0
          %v1491 = vpop.trf.xlu0
          %v1492 = vpop.trf.xlu0
          %v1493 = vpop.trf.xlu0
          %v1494 = vpop.trf.xlu0
          %v1495 = vpop.trf.xlu0
          %v1496 = vpop.trf.xlu0
          %v1497 = vpop.trf.xlu0
          %v1498 = vpop.trf.xlu0
          %v1499 = vpop.trf.xlu0
          %v1500 = vpop.trf.xlu0
          %v1501 = vpack.c.bf16 %v1486, %v1485
          %v1502 = vpack.c.bf16 %v1488, %v1487
          %v1503 = vpack.c.bf16 %v1490, %v1489
          %v1504 = vpack.c.bf16 %v1492, %v1491
          %v1505 = vpack.c.bf16 %v1494, %v1493
          %v1506 = vpack.c.bf16 %v1496, %v1495
          %v1507 = vpack.c.bf16 %v1498, %v1497
          %v1508 = vpack.c.bf16 %v1500, %v1499
          %1509 = vst [vmem:[#allocation3] sm:$0xff] %v1501
          %1510 = vst [vmem:[#allocation3 + $0x8] sm:$0xff] %v1502
          %1511 = vst [vmem:[#allocation3 + $0x10] sm:$0xff] %v1503
          %1512 = vst [vmem:[#allocation3 + $0x18] sm:$0xff] %v1504
          %1513 = vst [vmem:[#allocation3 + $0x20] sm:$0xff] %v1505
          %1514 = vst [vmem:[#allocation3 + $0x28] sm:$0xff] %v1506
          %1515 = vst [vmem:[#allocation3 + $0x30] sm:$0xff] %v1507
          %1516 = vst [vmem:[#allocation3 + $0x38] sm:$0xff] %v1508
          %v1517 = vld [vmem:[#allocation10] sm:$0xf]
          %v1518 = vld [vmem:[#allocation10 + $0x4] sm:$0xf]
          %v1519 = vld [vmem:[#allocation10 + $0x8] sm:$0xf]
          %v1520 = vld [vmem:[#allocation10 + $0xc] sm:$0xf]
          %v1521 = vld [vmem:[#allocation10 + $0x10] sm:$0xf]
          %v1522 = vld [vmem:[#allocation10 + $0x14] sm:$0xf]
          %v1523 = vld [vmem:[#allocation10 + $0x18] sm:$0xf]
          %v1524 = vld [vmem:[#allocation10 + $0x1c] sm:$0xf]
          %v1525 = vld [vmem:[#allocation10 + $0x20] sm:$0xf]
          %v1526 = vld [vmem:[#allocation10 + $0x24] sm:$0xf]
          %v1527 = vld [vmem:[#allocation10 + $0x28] sm:$0xf]
          %v1528 = vld [vmem:[#allocation10 + $0x2c] sm:$0xf]
          %v1529 = vld [vmem:[#allocation10 + $0x30] sm:$0xf]
          %v1530 = vld [vmem:[#allocation10 + $0x34] sm:$0xf]
          %v1531 = vld [vmem:[#allocation10 + $0x38] sm:$0xf]
          %v1532 = vld [vmem:[#allocation10 + $0x3c] sm:$0xf]
          %v1549 = vunpack.c.l.b16 %v1517
          %v1550 = vunpack.c.l.b16 %v1518
          %v1551 = vunpack.c.l.b16 %v1519
          %v1552 = vunpack.c.l.b16 %v1520
          %v1553 = vunpack.c.l.b16 %v1521
          %v1554 = vunpack.c.l.b16 %v1522
          %v1555 = vunpack.c.l.b16 %v1523
          %v1556 = vunpack.c.l.b16 %v1524
          %v1557 = vunpack.c.l.b16 %v1525
          %v1558 = vunpack.c.l.b16 %v1526
          %v1559 = vunpack.c.l.b16 %v1527
          %v1560 = vunpack.c.l.b16 %v1528
          %v1561 = vunpack.c.l.b16 %v1529
          %v1562 = vunpack.c.l.b16 %v1530
          %v1563 = vunpack.c.l.b16 %v1531
          %v1564 = vunpack.c.l.b16 %v1532
          %v1565 = vpack.c.b16 %v1550, %v1549
          %v1566 = vpack.c.b16 %v1552, %v1551
          %v1567 = vpack.c.b16 %v1554, %v1553
          %v1568 = vpack.c.b16 %v1556, %v1555
          %v1569 = vpack.c.b16 %v1558, %v1557
          %v1570 = vpack.c.b16 %v1560, %v1559
          %v1571 = vpack.c.b16 %v1562, %v1561
          %v1572 = vpack.c.b16 %v1564, %v1563
          %1581 = vmatprep.subr.bf16.mxu0 0
          %1582 = vmatpush1.bf16.msra.mxu0 %v1565
          %1583 = vmatprep.subr.bf16.mxu0 0
          %1584 = vmatpush1.bf16.msra.mxu0 %v1566
          %1585 = vmatprep.subr.bf16.mxu0 0
          %1586 = vmatpush1.bf16.msra.mxu0 %v1567
          %1587 = vmatprep.subr.bf16.mxu0 0
          %1588 = vmatpush1.bf16.msra.mxu0 %v1568
          %1589 = vmatprep.subr.bf16.mxu0 0
          %1590 = vmatpush1.bf16.msra.mxu0 %v1569
          %1591 = vmatprep.subr.bf16.mxu0 0
          %1592 = vmatpush1.bf16.msra.mxu0 %v1570
          %1593 = vmatprep.subr.bf16.mxu0 0
          %1594 = vmatpush1.bf16.msra.mxu0 %v1571
          %1595 = vmatprep.subr.bf16.mxu0 0
          %1596 = vmatpush1.bf16.msra.mxu0 %v1572
          %1597 = vmatprep.subr.bf16.mxu0 0
          %1598 = vmatpush1.bf16.msra.mxu0 0
          %1599 = vmatprep.subr.bf16.mxu0 0
          %1600 = vmatpush1.bf16.msra.mxu0 0
          %1601 = vmatprep.subr.bf16.mxu0 0
          %1602 = vmatpush1.bf16.msra.mxu0 0
          %1603 = vmatprep.subr.bf16.mxu0 0
          %1604 = vmatpush1.bf16.msra.mxu0 0
          %1605 = vmatprep.subr.bf16.mxu0 0
          %1606 = vmatpush1.bf16.msra.mxu0 0
          %1607 = vmatprep.subr.bf16.mxu0 0
          %1608 = vmatpush1.bf16.msra.mxu0 0
          %1609 = vmatprep.subr.bf16.mxu0 0
          %1610 = vmatpush1.bf16.msra.mxu0 0
          %1611 = vmatprep.subr.bf16.mxu0 0
          %1612 = vmatpush1.bf16.msra.mxu0 0
          %1613 = vmatprep.mubr.bf16.mxu0 0
          %1614 = vmatmul.mubr.bf16.gmra.mrb[0].mxu0 %v1453
          %v1615 = vpop.f32.mrb[0].mxu0
          %v1616 = vadd.f32 0.0, %v1615
          %v1617 = vpop.f32.mrb[0].mxu0
          %v1618 = vpop.f32.mrb[0].mxu0
          %v1619 = vadd.f32 0.0, %v1618
          %v1620 = vpop.f32.mrb[0].mxu0
          %1621 = vmatprep.mubr.bf16.mxu0 0
          %1622 = vmatmul.mubr.bf16.gmra.mrb[0].mxu0 %v1454
          %v1623 = vpop.f32.mrb[0].mxu0
          %v1624 = vadd.f32 0.0, %v1623
          %v1625 = vpop.f32.mrb[0].mxu0
          %v1626 = vpop.f32.mrb[0].mxu0
          %v1627 = vadd.f32 0.0, %v1626
          %v1628 = vpop.f32.mrb[0].mxu0
          %1629 = vmatprep.mubr.bf16.mxu0 0
          %1630 = vmatmul.mubr.bf16.gmra.mrb[0].mxu0 %v1455
          %v1631 = vpop.f32.mrb[0].mxu0
          %v1632 = vadd.f32 0.0, %v1631
          %v1633 = vpop.f32.mrb[0].mxu0
          %v1634 = vpop.f32.mrb[0].mxu0
          %v1635 = vadd.f32 0.0, %v1634
          %v1636 = vpop.f32.mrb[0].mxu0
          %1637 = vmatprep.mubr.bf16.mxu0 0
          %1638 = vmatmul.mubr.bf16.gmra.mrb[0].mxu0 %v1456
          %v1639 = vpop.f32.mrb[0].mxu0
          %v1640 = vadd.f32 0.0, %v1639
          %v1641 = vpop.f32.mrb[0].mxu0
          %v1642 = vpop.f32.mrb[0].mxu0
          %v1643 = vadd.f32 0.0, %v1642
          %v1644 = vpop.f32.mrb[0].mxu0
          %1645 = vmatprep.mubr.bf16.mxu0 0
          %1646 = vmatmul.mubr.bf16.gmra.mrb[0].mxu0 %v1457
          %v1647 = vpop.f32.mrb[0].mxu0
          %v1648 = vadd.f32 0.0, %v1647
          %v1649 = vpop.f32.mrb[0].mxu0
          %v1650 = vpop.f32.mrb[0].mxu0
          %v1651 = vadd.f32 0.0, %v1650
          %v1652 = vpop.f32.mrb[0].mxu0
          %1653 = vmatprep.mubr.bf16.mxu0 0
          %1654 = vmatmul.mubr.bf16.gmra.mrb[0].mxu0 %v1458
          %v1655 = vpop.f32.mrb[0].mxu0
          %v1656 = vadd.f32 0.0, %v1655
          %v1657 = vpop.f32.mrb[0].mxu0
          %v1658 = vpop.f32.mrb[0].mxu0
          %v1659 = vadd.f32 0.0, %v1658
          %v1660 = vpop.f32.mrb[0].mxu0
          %1661 = vmatprep.mubr.bf16.mxu0 0
          %1662 = vmatmul.mubr.bf16.gmra.mrb[0].mxu0 %v1459
          %v1663 = vpop.f32.mrb[0].mxu0
          %v1664 = vadd.f32 0.0, %v1663
          %v1665 = vpop.f32.mrb[0].mxu0
          %v1666 = vpop.f32.mrb[0].mxu0
          %v1667 = vadd.f32 0.0, %v1666
          %v1668 = vpop.f32.mrb[0].mxu0
          %1669 = vmatprep.mubr.bf16.mxu0 0
          %1670 = vmatmul.mubr.bf16.gmra.mrb[0].mxu0 %v1460
          %v1671 = vpop.f32.mrb[0].mxu0
          %v1672 = vadd.f32 0.0, %v1671
          %v1673 = vpop.f32.mrb[0].mxu0
          %v1674 = vpop.f32.mrb[0].mxu0
          %v1675 = vadd.f32 0.0, %v1674
          %v1676 = vpop.f32.mrb[0].mxu0
          %1677 = vdwg.mxu0
          %v1678 = vpack.c.bf16 %v1619, %v1616
          %v1679 = vpack.c.bf16 %v1627, %v1624
          %v1680 = vpack.c.bf16 %v1635, %v1632
          %v1681 = vpack.c.bf16 %v1643, %v1640
          %v1682 = vpack.c.bf16 %v1651, %v1648
          %v1683 = vpack.c.bf16 %v1659, %v1656
          %v1684 = vpack.c.bf16 %v1667, %v1664
          %v1685 = vpack.c.bf16 %v1675, %v1672
          %v1694 = vunpack.c.l.b16 %v1678
          %v1695 = vunpack.c.h.b16 %v1678
          %v1696 = vunpack.c.l.b16 %v1679
          %v1697 = vunpack.c.h.b16 %v1679
          %v1698 = vunpack.c.l.b16 %v1680
          %v1699 = vunpack.c.h.b16 %v1680
          %v1700 = vunpack.c.l.b16 %v1681
          %v1701 = vunpack.c.h.b16 %v1681
          %v1702 = vunpack.c.l.b16 %v1682
          %v1703 = vunpack.c.h.b16 %v1682
          %v1704 = vunpack.c.l.b16 %v1683
          %v1705 = vunpack.c.h.b16 %v1683
          %v1706 = vunpack.c.l.b16 %v1684
          %v1707 = vunpack.c.h.b16 %v1684
          %v1708 = vunpack.c.l.b16 %v1685
          %v1709 = vunpack.c.h.b16 %v1685
          %v1710 = vpack.c.b16 %v1694, %v1694
          %v1711 = vpack.c.b16 %v1695, %v1695
          %v1712 = vpack.c.b16 %v1696, %v1696
          %v1713 = vpack.c.b16 %v1697, %v1697
          %v1714 = vpack.c.b16 %v1698, %v1698
          %v1715 = vpack.c.b16 %v1699, %v1699
          %v1716 = vpack.c.b16 %v1700, %v1700
          %v1717 = vpack.c.b16 %v1701, %v1701
          %v1718 = vpack.c.b16 %v1702, %v1702
          %v1719 = vpack.c.b16 %v1703, %v1703
          %v1720 = vpack.c.b16 %v1704, %v1704
          %v1721 = vpack.c.b16 %v1705, %v1705
          %v1722 = vpack.c.b16 %v1706, %v1706
          %v1723 = vpack.c.b16 %v1707, %v1707
          %v1724 = vpack.c.b16 %v1708, %v1708
          %v1725 = vpack.c.b16 %v1709, %v1709
          %1742 = vst [vmem:[%s304] sm:$0xf] %v1710
          %1743 = vst [vmem:[%s304 + $0x4] sm:$0xf] %v1711
          %1744 = vst [vmem:[%s304 + $0x8] sm:$0xf] %v1712
          %1745 = vst [vmem:[%s304 + $0xc] sm:$0xf] %v1713
          %1746 = vst [vmem:[%s304 + $0x10] sm:$0xf] %v1714
          %1747 = vst [vmem:[%s304 + $0x14] sm:$0xf] %v1715
          %1748 = vst [vmem:[%s304 + $0x18] sm:$0xf] %v1716
          %1749 = vst [vmem:[%s304 + $0x1c] sm:$0xf] %v1717
          %1750 = vst [vmem:[%s304 + $0x20] sm:$0xf] %v1718
          %1751 = vst [vmem:[%s304 + $0x24] sm:$0xf] %v1719
          %1752 = vst [vmem:[%s304 + $0x28] sm:$0xf] %v1720
          %1753 = vst [vmem:[%s304 + $0x2c] sm:$0xf] %v1721
          %1754 = vst [vmem:[%s304 + $0x30] sm:$0xf] %v1722
          %1755 = vst [vmem:[%s304 + $0x34] sm:$0xf] %v1723
          %1756 = vst [vmem:[%s304 + $0x38] sm:$0xf] %v1724
          %1757 = vst [vmem:[%s304 + $0x3c] sm:$0xf] %v1725
        $region56: #{tpu_custom_call.1} parent=35 // pred_fallthru
          _
        %s1758 = smul.u32 %s33, 128
        %s1759 = sshra.s32 %s1758, 4
        %s1760 = sand.u32 %s1758, 15
        %s1761 = smul.addr %s1759, 8
        %s1762 = scalar_lea.vmem [#allocation2], %s1761
        %v1763 = vld [vmem:[%s1762] sm:$0xff]
        %v1764 = vld [vmem:[%s1762 + $0x8] sm:$0xff]
        %v1765 = vld [vmem:[%s1762 + $0x10] sm:$0xff]
        %v1766 = vld [vmem:[%s1762 + $0x18] sm:$0xff]
        %v1767 = vld [vmem:[%s1762 + $0x20] sm:$0xff]
        %v1768 = vld [vmem:[%s1762 + $0x28] sm:$0xff]
        %v1769 = vld [vmem:[%s1762 + $0x30] sm:$0xff]
        %v1770 = vld [vmem:[%s1762 + $0x38] sm:$0xff]
        %v1771 = vld [vmem:[#allocation3] sm:$0xff]
        %v1772 = vld [vmem:[#allocation3 + $0x8] sm:$0xff]
        %v1773 = vld [vmem:[#allocation3 + $0x10] sm:$0xff]
        %v1774 = vld [vmem:[#allocation3 + $0x18] sm:$0xff]
        %v1775 = vld [vmem:[#allocation3 + $0x20] sm:$0xff]
        %v1776 = vld [vmem:[#allocation3 + $0x28] sm:$0xff]
        %v1777 = vld [vmem:[#allocation3 + $0x30] sm:$0xff]
        %v1778 = vld [vmem:[#allocation3 + $0x38] sm:$0xff]
        %1779 = vmatprep.subr.bf16.mxu0 0
        %1780 = vmatpush1.bf16.msra.mxu0 %v1771
        %1781 = vmatprep.subr.bf16.mxu0 0
        %1782 = vmatpush1.bf16.msra.mxu0 %v1772
        %1783 = vmatprep.subr.bf16.mxu0 0
        %1784 = vmatpush1.bf16.msra.mxu0 %v1773
        %1785 = vmatprep.subr.bf16.mxu0 0
        %1786 = vmatpush1.bf16.msra.mxu0 %v1774
        %1787 = vmatprep.subr.bf16.mxu0 0
        %1788 = vmatpush1.bf16.msra.mxu0 %v1775
        %1789 = vmatprep.subr.bf16.mxu0 0
        %1790 = vmatpush1.bf16.msra.mxu0 %v1776
        %1791 = vmatprep.subr.bf16.mxu0 0
        %1792 = vmatpush1.bf16.msra.mxu0 %v1777
        %1793 = vmatprep.subr.bf16.mxu0 0
        %1794 = vmatpush1.bf16.msra.mxu0 %v1778
        %1795 = vmatprep.subr.bf16.mxu0 0
        %1796 = vmatpush1.bf16.msra.mxu0 0
        %1797 = vmatprep.subr.bf16.mxu0 0
        %1798 = vmatpush1.bf16.msra.mxu0 0
        %1799 = vmatprep.subr.bf16.mxu0 0
        %1800 = vmatpush1.bf16.msra.mxu0 0
        %1801 = vmatprep.subr.bf16.mxu0 0
        %1802 = vmatpush1.bf16.msra.mxu0 0
        %1803 = vmatprep.subr.bf16.mxu0 0
        %1804 = vmatpush1.bf16.msra.mxu0 0
        %1805 = vmatprep.subr.bf16.mxu0 0
        %1806 = vmatpush1.bf16.msra.mxu0 0
        %1807 = vmatprep.subr.bf16.mxu0 0
        %1808 = vmatpush1.bf16.msra.mxu0 0
        %1809 = vmatprep.subr.bf16.mxu0 0
        %1810 = vmatpush1.bf16.msra.mxu0 0
        %1811 = vmatprep.mubr.bf16.mxu0 0
        %1812 = vmatmul.mubr.bf16.gmra.mrb[0].mxu0 %v1763
        %v1813 = vpop.f32.mrb[0].mxu0
        %v1814 = vadd.f32 0.0, %v1813
        %v1815 = vpop.f32.mrb[0].mxu0
        %v1816 = vpop.f32.mrb[0].mxu0
        %v1817 = vadd.f32 0.0, %v1816
        %v1818 = vpop.f32.mrb[0].mxu0
        %1819 = vmatprep.mubr.bf16.mxu0 0
        %1820 = vmatmul.mubr.bf16.gmra.mrb[0].mxu0 %v1764
        %v1821 = vpop.f32.mrb[0].mxu0
        %v1822 = vadd.f32 0.0, %v1821
        %v1823 = vpop.f32.mrb[0].mxu0
        %v1824 = vpop.f32.mrb[0].mxu0
        %v1825 = vadd.f32 0.0, %v1824
        %v1826 = vpop.f32.mrb[0].mxu0
        %1827 = vmatprep.mubr.bf16.mxu0 0
        %1828 = vmatmul.mubr.bf16.gmra.mrb[0].mxu0 %v1765
        %v1829 = vpop.f32.mrb[0].mxu0
        %v1830 = vadd.f32 0.0, %v1829
        %v1831 = vpop.f32.mrb[0].mxu0
        %v1832 = vpop.f32.mrb[0].mxu0
        %v1833 = vadd.f32 0.0, %v1832
        %v1834 = vpop.f32.mrb[0].mxu0
        %1835 = vmatprep.mubr.bf16.mxu0 0
        %1836 = vmatmul.mubr.bf16.gmra.mrb[0].mxu0 %v1766
        %v1837 = vpop.f32.mrb[0].mxu0
        %v1838 = vadd.f32 0.0, %v1837
        %v1839 = vpop.f32.mrb[0].mxu0
        %v1840 = vpop.f32.mrb[0].mxu0
        %v1841 = vadd.f32 0.0, %v1840
        %v1842 = vpop.f32.mrb[0].mxu0
        %1843 = vmatprep.mubr.bf16.mxu0 0
        %1844 = vmatmul.mubr.bf16.gmra.mrb[0].mxu0 %v1767
        %v1845 = vpop.f32.mrb[0].mxu0
        %v1846 = vadd.f32 0.0, %v1845
        %v1847 = vpop.f32.mrb[0].mxu0
        %v1848 = vpop.f32.mrb[0].mxu0
        %v1849 = vadd.f32 0.0, %v1848
        %v1850 = vpop.f32.mrb[0].mxu0
        %1851 = vmatprep.mubr.bf16.mxu0 0
        %1852 = vmatmul.mubr.bf16.gmra.mrb[0].mxu0 %v1768
        %v1853 = vpop.f32.mrb[0].mxu0
        %v1854 = vadd.f32 0.0, %v1853
        %v1855 = vpop.f32.mrb[0].mxu0
        %v1856 = vpop.f32.mrb[0].mxu0
        %v1857 = vadd.f32 0.0, %v1856
        %v1858 = vpop.f32.mrb[0].mxu0
        %1859 = vmatprep.mubr.bf16.mxu0 0
        %1860 = vmatmul.mubr.bf16.gmra.mrb[0].mxu0 %v1769
        %v1861 = vpop.f32.mrb[0].mxu0
        %v1862 = vadd.f32 0.0, %v1861
        %v1863 = vpop.f32.mrb[0].mxu0
        %v1864 = vpop.f32.mrb[0].mxu0
        %v1865 = vadd.f32 0.0, %v1864
        %v1866 = vpop.f32.mrb[0].mxu0
        %1867 = vmatprep.mubr.bf16.mxu0 0
        %1868 = vmatmul.mubr.bf16.gmra.mrb[0].mxu0 %v1770
        %v1869 = vpop.f32.mrb[0].mxu0
        %v1870 = vadd.f32 0.0, %v1869
        %v1871 = vpop.f32.mrb[0].mxu0
        %v1872 = vpop.f32.mrb[0].mxu0
        %v1873 = vadd.f32 0.0, %v1872
        %v1874 = vpop.f32.mrb[0].mxu0
        %1875 = vdwg.mxu0
        %v1876 = vmul.f32 %v1814, 0.5
        %v1877 = vmul.f32 %v1817, 0.5
        %v1878 = vmul.f32 %v1822, 0.5
        %v1879 = vmul.f32 %v1825, 0.5
        %v1880 = vmul.f32 %v1830, 0.5
        %v1881 = vmul.f32 %v1833, 0.5
        %v1882 = vmul.f32 %v1838, 0.5
        %v1883 = vmul.f32 %v1841, 0.5
        %v1884 = vmul.f32 %v1846, 0.5
        %v1885 = vmul.f32 %v1849, 0.5
        %v1886 = vmul.f32 %v1854, 0.5
        %v1887 = vmul.f32 %v1857, 0.5
        %v1888 = vmul.f32 %v1862, 0.5
        %v1889 = vmul.f32 %v1865, 0.5
        %v1890 = vmul.f32 %v1870, 0.5
        %v1891 = vmul.f32 %v1873, 0.5
        %v1892 = vtanh.pop %v1876
        %v1893 = vtanh.pop %v1877
        %v1894 = vtanh.pop %v1878
        %v1895 = vtanh.pop %v1879
        %v1896 = vtanh.pop %v1880
        %v1897 = vtanh.pop %v1881
        %v1898 = vtanh.pop %v1882
        %v1899 = vtanh.pop %v1883
        %v1900 = vtanh.pop %v1884
        %v1901 = vtanh.pop %v1885
        %v1902 = vtanh.pop %v1886
        %v1903 = vtanh.pop %v1887
        %v1904 = vtanh.pop %v1888
        %v1905 = vtanh.pop %v1889
        %v1906 = vtanh.pop %v1890
        %v1907 = vtanh.pop %v1891
        %v1908 = vmul.f32 %v1892, 0.5
        %v1909 = vmul.f32 %v1893, 0.5
        %v1910 = vmul.f32 %v1894, 0.5
        %v1911 = vmul.f32 %v1895, 0.5
        %v1912 = vmul.f32 %v1896, 0.5
        %v1913 = vmul.f32 %v1897, 0.5
        %v1914 = vmul.f32 %v1898, 0.5
        %v1915 = vmul.f32 %v1899, 0.5
        %v1916 = vmul.f32 %v1900, 0.5
        %v1917 = vmul.f32 %v1901, 0.5
        %v1918 = vmul.f32 %v1902, 0.5
        %v1919 = vmul.f32 %v1903, 0.5
        %v1920 = vmul.f32 %v1904, 0.5
        %v1921 = vmul.f32 %v1905, 0.5
        %v1922 = vmul.f32 %v1906, 0.5
        %v1923 = vmul.f32 %v1907, 0.5
        %v1924 = vadd.f32 %v1908, 0.5
        %v1925 = vadd.f32 %v1909, 0.5
        %v1926 = vadd.f32 %v1910, 0.5
        %v1927 = vadd.f32 %v1911, 0.5
        %v1928 = vadd.f32 %v1912, 0.5
        %v1929 = vadd.f32 %v1913, 0.5
        %v1930 = vadd.f32 %v1914, 0.5
        %v1931 = vadd.f32 %v1915, 0.5
        %v1932 = vadd.f32 %v1916, 0.5
        %v1933 = vadd.f32 %v1917, 0.5
        %v1934 = vadd.f32 %v1918, 0.5
        %v1935 = vadd.f32 %v1919, 0.5
        %v1936 = vadd.f32 %v1920, 0.5
        %v1937 = vadd.f32 %v1921, 0.5
        %v1938 = vadd.f32 %v1922, 0.5
        %v1939 = vadd.f32 %v1923, 0.5
        %v1940 = vpack.c.bf16 %v1925, %v1924
        %v1941 = vpack.c.bf16 %v1927, %v1926
        %v1942 = vpack.c.bf16 %v1929, %v1928
        %v1943 = vpack.c.bf16 %v1931, %v1930
        %v1944 = vpack.c.bf16 %v1933, %v1932
        %v1945 = vpack.c.bf16 %v1935, %v1934
        %v1946 = vpack.c.bf16 %v1937, %v1936
        %v1947 = vpack.c.bf16 %v1939, %v1938
        %v1956 = vunpack.c.l.b16 %v1940
        %v1957 = vunpack.c.h.b16 %v1940
        %v1958 = vunpack.c.l.b16 %v1941
        %v1959 = vunpack.c.h.b16 %v1941
        %v1960 = vunpack.c.l.b16 %v1942
        %v1961 = vunpack.c.h.b16 %v1942
        %v1962 = vunpack.c.l.b16 %v1943
        %v1963 = vunpack.c.h.b16 %v1943
        %v1964 = vunpack.c.l.b16 %v1944
        %v1965 = vunpack.c.h.b16 %v1944
        %v1966 = vunpack.c.l.b16 %v1945
        %v1967 = vunpack.c.h.b16 %v1945
        %v1968 = vunpack.c.l.b16 %v1946
        %v1969 = vunpack.c.h.b16 %v1946
        %v1970 = vunpack.c.l.b16 %v1947
        %v1971 = vunpack.c.h.b16 %v1947
        %v1972 = vpack.c.b16 %v1956, %v1956
        %v1973 = vpack.c.b16 %v1957, %v1957
        %v1974 = vpack.c.b16 %v1958, %v1958
        %v1975 = vpack.c.b16 %v1959, %v1959
        %v1976 = vpack.c.b16 %v1960, %v1960
        %v1977 = vpack.c.b16 %v1961, %v1961
        %v1978 = vpack.c.b16 %v1962, %v1962
        %v1979 = vpack.c.b16 %v1963, %v1963
        %v1980 = vpack.c.b16 %v1964, %v1964
        %v1981 = vpack.c.b16 %v1965, %v1965
        %v1982 = vpack.c.b16 %v1966, %v1966
        %v1983 = vpack.c.b16 %v1967, %v1967
        %v1984 = vpack.c.b16 %v1968, %v1968
        %v1985 = vpack.c.b16 %v1969, %v1969
        %v1986 = vpack.c.b16 %v1970, %v1970
        %v1987 = vpack.c.b16 %v1971, %v1971
        %2004 = vst [vmem:[%s311] sm:$0xf] %v1972
        %2005 = vst [vmem:[%s311 + $0x4] sm:$0xf] %v1973
        %2006 = vst [vmem:[%s311 + $0x8] sm:$0xf] %v1974
        %2007 = vst [vmem:[%s311 + $0xc] sm:$0xf] %v1975
        %2008 = vst [vmem:[%s311 + $0x10] sm:$0xf] %v1976
        %2009 = vst [vmem:[%s311 + $0x14] sm:$0xf] %v1977
        %2010 = vst [vmem:[%s311 + $0x18] sm:$0xf] %v1978
        %2011 = vst [vmem:[%s311 + $0x1c] sm:$0xf] %v1979
        %2012 = vst [vmem:[%s311 + $0x20] sm:$0xf] %v1980
        %2013 = vst [vmem:[%s311 + $0x24] sm:$0xf] %v1981
        %2014 = vst [vmem:[%s311 + $0x28] sm:$0xf] %v1982
        %2015 = vst [vmem:[%s311 + $0x2c] sm:$0xf] %v1983
        %2016 = vst [vmem:[%s311 + $0x30] sm:$0xf] %v1984
        %2017 = vst [vmem:[%s311 + $0x34] sm:$0xf] %v1985
        %2018 = vst [vmem:[%s311 + $0x38] sm:$0xf] %v1986
        %2019 = vst [vmem:[%s311 + $0x3c] sm:$0xf] %v1987
        %s2020 = sand.u32 %s137, 1
        %s2021 = scalar_lea.sflag [#allocation6], %s2020
        %s2022 = sand.u32 %s137, 1
        %s2023 = smul.addr %s2022, 64
        %s2024 = scalar_lea.vmem [#allocation12], %s2023
        %s2025 = sand.u32 %s165, 1
        %s2026 = scalar_lea.sflag [#allocation14], %s2025
        %s2027 = sand.u32 %s165, 1
        %s2028 = smul.addr %s2027, 64
        %s2029 = scalar_lea.vmem [#allocation13], %s2028
        // Predicated region
        $region57: #{tpu_custom_call.1} parent=35 // pred_check
          %p2030 = pneg %p147
        $region58: #{tpu_custom_call.1} parent=35 // pred_check_branch
          %2032 = sbr.rel (%p2030) target = $region60
        $region59: #{tpu_custom_call.1} parent=35 // pred_region
          %s2034 = ssub.s32 1024, 1024
          %2035 = vsyncadd %s2021, %s2034
          %s2036 = smul.addr %s32, 16
          %s2037 = smul.addr %s2036, 64
          %s2038 = scalar_lea.hbm %s4, %s2037
          %s2039 = sshll.u32 %s2024, 4
          %s2040 = int_to_ptr.vmem [resolvable:$true] %s2039
          %2045 = dma.vmem_to_hbm [thread:$0]  %s2040, 1024, %s2038, %s2021, 64, 64, 4
        $region60: #{tpu_custom_call.1} parent=35 // pred_fallthru
          _
        // Predicated region
        $region61: #{tpu_custom_call.1} parent=35 // pred_check
          %p2046 = pneg %p175
        $region62: #{tpu_custom_call.1} parent=35 // pred_check_branch
          %2048 = sbr.rel (%p2046) target = $region64
        $region63: #{tpu_custom_call.1} parent=35 // pred_region
          %s2049 = smul.u32 16, %s33
          %s2051 = ssub.s32 1024, 1024
          %2052 = vsyncadd %s2026, %s2051
          %s2053 = smul.addr %s32, 16
          %s2054 = sadd.s32 %s2049, %s2053
          %s2055 = smul.addr %s2054, 64
          %s2056 = scalar_lea.hbm %s5, %s2055
          %s2057 = sshll.u32 %s2029, 4
          %s2058 = int_to_ptr.vmem [resolvable:$true] %s2057
          %2063 = dma.vmem_to_hbm [thread:$0]  %s2058, 1024, %s2056, %s2026, 64, 64, 4
        $region64: #{tpu_custom_call.1} parent=35 // pred_fallthru
          _
      $region36: #{tpu_custom_call.1} parent=5 // pred_fallthru
        _
      %p2064 = scmp.le.s32.totalorder 2, %s23
      // Predicated region
      $region65: #{tpu_custom_call.1} parent=5 // pred_check
        %p2065 = pneg %p2064
      $region66: #{tpu_custom_call.1} parent=5 // pred_check_branch
        %2067 = sbr.rel (%p2065) target = $region68
      $region67: #{tpu_custom_call.1} parent=5 // pred_region
        %s2068 = ssub.s32 %s23, 2
        // Predicated region
        $region69: #{tpu_custom_call.1} parent=67 // pred_check
          %p2069 = pneg %p153
        $region70: #{tpu_custom_call.1} parent=67 // pred_check_branch
          %2071 = sbr.rel (%p2069) target = $region72
        $region71: #{tpu_custom_call.1} parent=67 // pred_region
          %s2072 = sand.u32 %s138, 1
          %s2073 = scalar_lea.sflag [#allocation6], %s2072
          %s2074 = sand.u32 %s138, 1
          %s2075 = smul.addr %s2074, 64
          %s2076 = scalar_lea.vmem [#allocation12], %s2075
          %2077 = dma.done %s2073, 1024
        $region72: #{tpu_custom_call.1} parent=67 // pred_fallthru
          _
        // Predicated region
        $region73: #{tpu_custom_call.1} parent=67 // pred_check
          %p2078 = pneg %p181
        $region74: #{tpu_custom_call.1} parent=67 // pred_check_branch
          %2080 = sbr.rel (%p2078) target = $region76
        $region75: #{tpu_custom_call.1} parent=67 // pred_region
          %s2081 = sand.u32 %s166, 1
          %s2082 = scalar_lea.sflag [#allocation14], %s2081
          %s2083 = sand.u32 %s166, 1
          %s2084 = smul.addr %s2083, 64
          %s2085 = scalar_lea.vmem [#allocation13], %s2084
          %2086 = dma.done %s2082, 1024
        $region76: #{tpu_custom_call.1} parent=67 // pred_fallthru
          _
      $region68: #{tpu_custom_call.1} parent=5 // pred_fallthru
        _
    $region6: #{tpu_custom_call.1} parent=1 // loop_footer
      %s27 = sadd.s32 1, %s23
    $region7: #{tpu_custom_call.1} parent=1 // loop_footer_branch
      %22 = sbr.rel target = $region3
    $region8: #{tpu_custom_call.1} parent=1 // loop_exit
      _
    %2087 = vsyncpa [#allocation5], 1
    %s2088 = scalar_lea.sflag [#allocation5], 1
    %2089 = vsyncpa %s2088, 1
    %2090 = vsyncpa [#allocation8], 1
    %2091 = vsyncpa [#allocation11], 1
    %2092 = vsyncpa [#allocation6], 1
    %s2093 = scalar_lea.sflag [#allocation6], 1
    %2094 = vsyncpa %s2093, 1
    %2095 = vsyncpa [#allocation14], 1
    %s2096 = scalar_lea.sflag [#allocation14], 1
    %2097 = vsyncpa %s2096, 1

</llo_original>
